<compile_context>
chip_gen: v7x
topology: tpu7x:2x2x1
jax: 0.10.0
libtpu: 0.0.40
codegen_flags: <defaults>
</compile_context>

<pallas_src>
import math

import jax
import jax.numpy as jnp
import numpy as np
from jax.experimental import pallas as pl
from jax.experimental.pallas import tpu as pltpu

# ---- model hyper-parameters (small, consistent with the module's forward) ----
SEQ = 8        # seq_len
BATCH = 2      # batch size
TOKENS = 32    # vocabulary
D = 32         # model dim
K = 16         # per-head dim
HEADS = 2      # heads
M = 64         # FFN hidden dim
LAYERS = 2     # number of TransformerBlocks
EPS = 1e-5     # nn.LayerNorm default eps

ROWS = SEQ * BATCH       # batch folded into the matmul row axis (16)
TPAD = 128               # lane padding -> lane-dense slabs / output store
NEG = -1e30              # masked / padded-logit bias (vanishes in softmax)
SEQ_SHIFT = SEQ.bit_length() - 1
assert SEQ == (1 << SEQ_SHIFT), "in-kernel mask uses shift/and; SEQ must be 2^n"

# ---- weight-slab row layout (all 128-lane padded, offsets 8-row aligned) ----
EMB_R0 = 0                                   # word_emb*sqrt(D): rows 0..31
DECW_R0 = EMB_R0 + TOKENS                    # decoder weight:   rows 32..63
LAYER_W_R0 = DECW_R0 + D                     # per-layer weights start at 64
LAYER_W_STRIDE = 3 * D + M                   # wqkv(32)+wc(32)+w1(32)+w2(64)=160
W_ROWS = LAYER_W_R0 + LAYERS * LAYER_W_STRIDE    # 384

# ---- const-slab row layout ----
POS_R0 = 0                                   # tiled pos emb: rows 0..15
DECB_ROW = POS_R0 + ROWS                     # combined decoder bias: row 16
LAYER_C_R0 = 24                              # per-layer constants (8-row aligned)
LAYER_C_STRIDE = 8                           # b1,b2,ln1w,ln1b,ln2w,ln2b (+2 pad)
C_ROWS = LAYER_C_R0 + LAYERS * LAYER_C_STRIDE    # 40


def _layer_norm(x, w, b):
    mu = jnp.mean(x, axis=-1, keepdims=True)
    var = jnp.mean((x - mu) ** 2, axis=-1, keepdims=True)
    return (x - mu) * jax.lax.rsqrt(var + EPS) * w + b


# ------------------------------ fused kernel ----------------------------------

def fused_transformer_kernel(ids_ref, w_ref, c_ref, out_ref):
    # ---- block-causal mask over the folded (batch*seq) row axis, in-kernel ----
    ri = jax.lax.broadcasted_iota(jnp.int32, (ROWS, ROWS), 0)
    ci = jax.lax.broadcasted_iota(jnp.int32, (ROWS, ROWS), 1)
    same_batch = (ri >> SEQ_SHIFT) == (ci >> SEQ_SHIFT)
    causal = (ri & (SEQ - 1)) >= (ci & (SEQ - 1))
    mask = jnp.where(same_batch & causal, 0.0, NEG)

    # ---- word embedding as a one-hot matmul (sqrt(D) folded into the table) ----
    vocab_iota = jax.lax.broadcasted_iota(jnp.int32, (ROWS, TOKENS), 1)
    onehot = (ids_ref[...] == vocab_iota).astype(jnp.float32)
    emb = w_ref[EMB_R0:EMB_R0 + TOKENS, 0:D]             # (32, 32)
    pos = c_ref[POS_R0:POS_R0 + ROWS, 0:D]               # (16, 32)
    x = jnp.maximum(
        jnp.dot(onehot, emb, preferred_element_type=jnp.float32) + pos, 0.0)

    scale = 1.0 / math.sqrt(K)
    for l in range(LAYERS):                              # static unroll (LAYERS==2)
        wb = LAYER_W_R0 + l * LAYER_W_STRIDE
        wqkv = w_ref[wb:wb + D, 0:3 * HEADS * K]         # (32, 96)
        wc = w_ref[wb + D:wb + 2 * D, 0:D]               # (32, 32)
        w1 = w_ref[wb + 2 * D:wb + 3 * D, 0:M]           # (32, 64)
        w2 = w_ref[wb + 3 * D:wb + 3 * D + M, 0:D]       # (64, 32)

        cb = LAYER_C_R0 + l * LAYER_C_STRIDE
        b1 = c_ref[cb + 0:cb + 1, 0:M]
        b2 = c_ref[cb + 1:cb + 2, 0:D]
        ln1w = c_ref[cb + 2:cb + 3, 0:D]
        ln1b = c_ref[cb + 3:cb + 4, 0:D]
        ln2w = c_ref[cb + 4:cb + 5, 0:D]
        ln2b = c_ref[cb + 5:cb + 6, 0:D]

        # fused QKV: one wide 2-D matmul; per-head q/k/v via static lane slices.
        qkv = jnp.dot(x, wqkv, preferred_element_type=jnp.float32)   # (16, 96)

        head_out = []
        for h in range(HEADS):
            q = qkv[:, h * K:(h + 1) * K]
            kk = qkv[:, HEADS * K + h * K:HEADS * K + (h + 1) * K]
            v = qkv[:, 2 * HEADS * K + h * K:2 * HEADS * K + (h + 1) * K]
            s = jax.lax.dot_general(                                  # q @ k^T
                q, kk, dimension_numbers=(((1,), (1,)), ((), ())),
                preferred_element_type=jnp.float32) * scale + mask
            s = s - jnp.max(s, axis=-1, keepdims=True)                # stable softmax
            e = jnp.exp(s)
            a = e * pl.reciprocal(jnp.sum(e, axis=-1, keepdims=True), approx=True)
            head_out.append(jnp.dot(a, v, preferred_element_type=jnp.float32))

        # heads -> model dim: lane concat + single dot against un-split wc.
        o = jnp.concatenate(head_out, axis=-1)                        # (16, 32)
        u = _layer_norm(
            jnp.dot(o, wc, preferred_element_type=jnp.float32) + x, ln1w, ln1b)

        z = jnp.maximum(
            jnp.dot(u, w1, preferred_element_type=jnp.float32) + b1, 0.0)
        z = jnp.dot(z, w2, preferred_element_type=jnp.float32) + b2
        x = _layer_norm(z + u, ln2w, ln2b)

    # ---- decoder (padded to 128 lanes) + log_softmax; lane-dense store ----
    dec_w = w_ref[DECW_R0:DECW_R0 + D, :]                             # (32, 128)
    dec_b = c_ref[DECB_ROW:DECB_ROW + 1, :]                           # (1, 128)
    logits = jnp.dot(x, dec_w, preferred_element_type=jnp.float32) + dec_b
    m = jnp.max(logits, axis=-1, keepdims=True)
    sh = logits - m
    lse = jnp.log(jnp.sum(jnp.exp(sh), axis=-1, keepdims=True))
    out_ref[...] = sh - lse


# -------------------------------- wrapper --------------------------------------

def _pad128(w):
    return jnp.pad(w, ((0, 0), (0, TPAD - w.shape[1])))


def prepare_params(params):
    """One-time re-layout of the PyTorch-style params into two packed slabs."""
    layers = params["layers"]

    # --- weight slab: every matmul weight, zero-padded to 128 lanes, row-stacked
    blocks = [_pad128(params["word_emb"] * math.sqrt(D)),   # sqrt(D) folded in
              _pad128(params["dec_w"])]
    for lp in layers:
        wqkv = jnp.concatenate([lp["wq"], lp["wk"], lp["wv"]], axis=1)  # (32, 96)
        blocks += [_pad128(wqkv), _pad128(lp["wc"]), _pad128(lp["w1"]),
                   _pad128(lp["w2"])]
    w_slab = jnp.concatenate(blocks, axis=0)
    assert w_slab.shape == (W_ROWS, TPAD)

    # --- const slab: pos (tiled batch-major), combined decoder bias, per-layer
    #     biases / layernorm params; all padded to 128 lanes.
    c_slab = jnp.zeros((C_ROWS, TPAD), jnp.float32)
    pos_tiled = jnp.tile(params["pos_emb"], (BATCH, 1))                 # (16, 32)
    c_slab = c_slab.at[POS_R0:POS_R0 + ROWS, 0:D].set(pos_tiled)
    dec_b = params["dec_b"] + params["bias"]                            # (1, 32)
    dec_b_pad = jnp.full((1, TPAD), NEG, jnp.float32).at[:, 0:TOKENS].set(dec_b)
    c_slab = c_slab.at[DECB_ROW:DECB_ROW + 1, :].set(dec_b_pad)
    for l, lp in enumerate(layers):
        r0 = LAYER_C_R0 + l * LAYER_C_STRIDE
        c_slab = c_slab.at[r0 + 0, 0:M].set(lp["b1"][0])
        c_slab = c_slab.at[r0 + 1, 0:D].set(lp["b2"][0])
        c_slab = c_slab.at[r0 + 2, 0:D].set(lp["ln1w"][0])
        c_slab = c_slab.at[r0 + 3, 0:D].set(lp["ln1b"][0])
        c_slab = c_slab.at[r0 + 4, 0:D].set(lp["ln2w"][0])
        c_slab = c_slab.at[r0 + 5, 0:D].set(lp["ln2b"][0])
    return w_slab, c_slab


@jax.jit
def transformer_forward(tok_ids, w_slab, c_slab):
    """tok_ids: (seq, batch) int32 -> (seq, batch, TOKENS) log-probs."""
    ids = tok_ids.astype(jnp.int32).T.reshape(ROWS, 1)     # batch-major rows
    vmem = pltpu.MemorySpace.VMEM
    out_pad = pl.pallas_call(                 # single call, no grid: all in VMEM
        fused_transformer_kernel,
        out_shape=jax.ShapeDtypeStruct((ROWS, TPAD), jnp.float32),
        in_specs=[pl.BlockSpec(memory_space=vmem),
                  pl.BlockSpec(memory_space=vmem),
                  pl.BlockSpec(memory_space=vmem)],
        out_specs=pl.BlockSpec(memory_space=vmem),
    )(ids, w_slab, c_slab)
    out = out_pad[:, :TOKENS].reshape(BATCH, SEQ, TOKENS)
    return jnp.transpose(out, (1, 0, 2))                   # (seq, batch, tokens)


# --------------------------- plain-JAX reference -------------------------------

def reference_forward(tok_ids, params):
    p, n = tok_ids.shape
    mask = jnp.where(jnp.arange(p)[:, None] >= jnp.arange(p)[None, :],
                     0.0, -jnp.inf).astype(jnp.float32)
    x = params["word_emb"][tok_ids] * math.sqrt(D)
    pos = params["pos_emb"][jnp.arange(p)][:, None, :]
    z = jnp.maximum(x + pos, 0.0)
    z = jnp.transpose(z, (1, 0, 2))                          # (n, p, d)
    for lp in params["layers"]:
        xq = z @ lp["wq"]; xk = z @ lp["wk"]; xv = z @ lp["wv"]
        Q = xq.reshape(n, p, HEADS, K).transpose(0, 2, 1, 3)
        Km = xk.reshape(n, p, HEADS, K).transpose(0, 2, 3, 1)
        V = xv.reshape(n, p, HEADS, K).transpose(0, 2, 1, 3)
        dot = jnp.matmul(Q, Km) / math.sqrt(K) + mask
        A = jax.nn.softmax(dot, axis=3)
        u = jnp.matmul(A, V).transpose(0, 2, 1, 3).reshape(n, p, HEADS * K)
        u = u @ lp["wc"]
        u = _layer_norm(u + z, lp["ln1w"], lp["ln1b"])
        ff = jnp.maximum(u @ lp["w1"] + lp["b1"], 0.0) @ lp["w2"] + lp["b2"]
        z = _layer_norm(ff + u, lp["ln2w"], lp["ln2b"])
    logits = z @ params["dec_w"] + params["dec_b"] + params["bias"]
    out = jax.nn.log_softmax(logits, axis=-1)
    return jnp.transpose(out, (1, 0, 2))


# ------------------------------ parameters -------------------------------------

def init_params(key):
    def nrm(key, shape):
        return (0.02 * jax.random.normal(key, shape)).astype(jnp.float32)

    keys = jax.random.split(key, 4 + LAYERS)
    params = {
        "word_emb": nrm(keys[0], (TOKENS, D)),
        "pos_emb": nrm(keys[1], (SEQ, D)),
        "dec_w": nrm(keys[2], (D, TOKENS)),
        "dec_b": nrm(keys[3], (1, TOKENS)),             # Linear bias
        "bias": jnp.zeros((1, TOKENS), jnp.float32),    # extra nn.Parameter, init 0
        "layers": [],
    }
    for li in range(LAYERS):
        lk = jax.random.split(keys[4 + li], 6)
        params["layers"].append({
            "wq": nrm(lk[0], (D, HEADS * K)),
            "wk": nrm(lk[1], (D, HEADS * K)),
            "wv": nrm(lk[2], (D, HEADS * K)),
            "wc": nrm(lk[3], (HEADS * K, D)),
            "w1": nrm(lk[4], (D, M)),
            "b1": jnp.zeros((1, M), jnp.float32),
            "w2": nrm(lk[5], (M, D)),
            "b2": jnp.zeros((1, D), jnp.float32),
            "ln1w": jnp.ones((1, D), jnp.float32),
            "ln1b": jnp.zeros((1, D), jnp.float32),
            "ln2w": jnp.ones((1, D), jnp.float32),
            "ln2b": jnp.zeros((1, D), jnp.float32),
        })
    return params


# ---------------------------------- main ----------------------------------------

if __name__ == "__main__":
    root = jax.random.PRNGKey(0)
    k_param, k_tok = jax.random.split(root)
    params = init_params(k_param)
    w_slab, c_slab = prepare_params(params)

    # token ids, PyTorch layout (seq, batch)
    tok_ids = jax.random.randint(k_tok, (SEQ, BATCH), 0, TOKENS, dtype=jnp.int32)

    out = jax.block_until_ready(transformer_forward(tok_ids, w_slab, c_slab))
    assert out.shape == (SEQ, BATCH, TOKENS)

    ref = jax.block_until_ready(reference_forward(tok_ids, params))
    np.testing.assert_allclose(np.asarray(out), np.asarray(ref), rtol=2e-3, atol=2e-3)

    print("KERNEL_OK")
</pallas_src>

<mosaic_0001>
module attributes {stable_mosaic.version = 11 : i64} {
  func.func @fused_transformer_kernel(%arg0: memref<16x1xi32, #tpu.memory_space<vmem>>, %arg1: memref<384x128xf32, #tpu.memory_space<vmem>>, %arg2: memref<40x128xf32, #tpu.memory_space<vmem>>, %arg3: memref<16x128xf32, #tpu.memory_space<vmem>>) attributes {dimension_semantics = [], scalar_prefetch = 0 : i64, scratch_operands = 0 : i64, tpu.core_type = #tpu.core_type<tc>} {
    %0 = tpu.iota {dimensions = array<i32: 0>} : vector<16x16xi32>
    %1 = tpu.iota {dimensions = array<i32: 1>} : vector<16x16xi32>
    %c3_i32 = arith.constant 3 : i32
    %2 = vector.broadcast %c3_i32 : i32 to vector<16x16xi32>
    %3 = arith.shrsi %0, %2 : vector<16x16xi32>
    %c3_i32_0 = arith.constant 3 : i32
    %4 = vector.broadcast %c3_i32_0 : i32 to vector<16x16xi32>
    %5 = arith.shrsi %1, %4 : vector<16x16xi32>
    %6 = arith.cmpi eq, %3, %5 : vector<16x16xi32>
    %c7_i32 = arith.constant 7 : i32
    %7 = vector.broadcast %c7_i32 : i32 to vector<16x16xi32>
    %8 = arith.andi %0, %7 : vector<16x16xi32>
    %c7_i32_1 = arith.constant 7 : i32
    %9 = vector.broadcast %c7_i32_1 : i32 to vector<16x16xi32>
    %10 = arith.andi %1, %9 : vector<16x16xi32>
    %11 = arith.cmpi sge, %8, %10 : vector<16x16xi32>
    %12 = arith.andi %6, %11 : vector<16x16xi1>
    %cst = arith.constant 0.000000e+00 : f32
    %cst_2 = arith.constant -1.000000e+30 : f32
    %13 = vector.broadcast %cst : f32 to vector<16x16xf32>
    %14 = vector.broadcast %cst_2 : f32 to vector<16x16xf32>
    %15 = arith.select %12, %13, %14 : vector<16x16xi1>, vector<16x16xf32>
    %16 = tpu.iota {dimensions = array<i32: 1>} : vector<16x32xi32>
    %c0 = arith.constant 0 : index
    %c0_3 = arith.constant 0 : index
    %17 = vector.load %arg0[%c0, %c0_3] : memref<16x1xi32, #tpu.memory_space<vmem>>, vector<16x1xi32>
    %18 = vector.broadcast %17 : vector<16x1xi32> to vector<16x32xi32>
    %19 = arith.cmpi eq, %18, %16 : vector<16x32xi32>
    %20 = arith.extui %19 : vector<16x32xi1> to vector<16x32xi32>
    %21 = arith.sitofp %20 : vector<16x32xi32> to vector<16x32xf32>
    %c0_4 = arith.constant 0 : index
    %c0_5 = arith.constant 0 : index
    %22 = vector.load %arg1[%c0_4, %c0_5] : memref<384x128xf32, #tpu.memory_space<vmem>>, vector<32x32xf32>
    %c0_6 = arith.constant 0 : index
    %c0_7 = arith.constant 0 : index
    %23 = vector.load %arg2[%c0_6, %c0_7] : memref<40x128xf32, #tpu.memory_space<vmem>>, vector<16x32xf32>
    %cst_8 = arith.constant dense<0.000000e+00> : vector<16x32xf32>
    %24 = tpu.matmul %21, %22, %cst_8 {dimension_numbers = #tpu.dot_dimension_numbers<[1], [0], [0], [1], [0, 0, 1, 1], [], []>} : vector<16x32xf32>, vector<32x32xf32>, vector<16x32xf32> -> vector<16x32xf32>
    %25 = arith.addf %24, %23 : vector<16x32xf32>
    %cst_9 = arith.constant 0.000000e+00 : f32
    %26 = vector.broadcast %cst_9 : f32 to vector<16x32xf32>
    %27 = arith.maximumf %25, %26 : vector<16x32xf32>
    %c64 = arith.constant 64 : index
    %c0_10 = arith.constant 0 : index
    %28 = vector.load %arg1[%c64, %c0_10] : memref<384x128xf32, #tpu.memory_space<vmem>>, vector<32x96xf32>
    %c96 = arith.constant 96 : index
    %c0_11 = arith.constant 0 : index
    %29 = vector.load %arg1[%c96, %c0_11] : memref<384x128xf32, #tpu.memory_space<vmem>>, vector<32x32xf32>
    %c128 = arith.constant 128 : index
    %c0_12 = arith.constant 0 : index
    %30 = vector.load %arg1[%c128, %c0_12] : memref<384x128xf32, #tpu.memory_space<vmem>>, vector<32x64xf32>
    %c160 = arith.constant 160 : index
    %c0_13 = arith.constant 0 : index
    %31 = vector.load %arg1[%c160, %c0_13] : memref<384x128xf32, #tpu.memory_space<vmem>>, vector<64x32xf32>
    %c24 = arith.constant 24 : index
    %c0_14 = arith.constant 0 : index
    %32 = vector.load %arg2[%c24, %c0_14] : memref<40x128xf32, #tpu.memory_space<vmem>>, vector<1x64xf32>
    %c25 = arith.constant 25 : index
    %c0_15 = arith.constant 0 : index
    %33 = vector.load %arg2[%c25, %c0_15] : memref<40x128xf32, #tpu.memory_space<vmem>>, vector<1x32xf32>
    %c26 = arith.constant 26 : index
    %c0_16 = arith.constant 0 : index
    %34 = vector.load %arg2[%c26, %c0_16] : memref<40x128xf32, #tpu.memory_space<vmem>>, vector<1x32xf32>
    %c27 = arith.constant 27 : index
    %c0_17 = arith.constant 0 : index
    %35 = vector.load %arg2[%c27, %c0_17] : memref<40x128xf32, #tpu.memory_space<vmem>>, vector<1x32xf32>
    %c28 = arith.constant 28 : index
    %c0_18 = arith.constant 0 : index
    %36 = vector.load %arg2[%c28, %c0_18] : memref<40x128xf32, #tpu.memory_space<vmem>>, vector<1x32xf32>
    %c29 = arith.constant 29 : index
    %c0_19 = arith.constant 0 : index
    %37 = vector.load %arg2[%c29, %c0_19] : memref<40x128xf32, #tpu.memory_space<vmem>>, vector<1x32xf32>
    %cst_20 = arith.constant dense<0.000000e+00> : vector<16x96xf32>
    %38 = tpu.matmul %27, %28, %cst_20 {dimension_numbers = #tpu.dot_dimension_numbers<[1], [0], [0], [1], [0, 0, 1, 1], [], []>} : vector<16x32xf32>, vector<32x96xf32>, vector<16x96xf32> -> vector<16x96xf32>
    %39 = vector.extract_strided_slice %38 {offsets = [0, 0], sizes = [16, 16], strides = [1, 1]} : vector<16x96xf32> to vector<16x16xf32>
    %40 = vector.extract_strided_slice %38 {offsets = [0, 32], sizes = [16, 16], strides = [1, 1]} : vector<16x96xf32> to vector<16x16xf32>
    %41 = vector.extract_strided_slice %38 {offsets = [0, 64], sizes = [16, 16], strides = [1, 1]} : vector<16x96xf32> to vector<16x16xf32>
    %cst_21 = arith.constant dense<0.000000e+00> : vector<16x16xf32>
    %42 = tpu.matmul %39, %40, %cst_21 {dimension_numbers = #tpu.dot_dimension_numbers<[1], [1], [0], [0], [0, 0, 1, 0], [], []>} : vector<16x16xf32>, vector<16x16xf32>, vector<16x16xf32> -> vector<16x16xf32>
    %cst_22 = arith.constant 2.500000e-01 : f32
    %43 = vector.broadcast %cst_22 : f32 to vector<16x16xf32>
    %44 = arith.mulf %42, %43 : vector<16x16xf32>
    %45 = arith.addf %44, %15 : vector<16x16xf32>
    %cst_23 = arith.constant dense<0xFF800000> : vector<16xf32>
    %46 = vector.multi_reduction <maximumf>, %45, %cst_23 [1] : vector<16x16xf32> to vector<16xf32>
    %47 = vector.shape_cast %46 : vector<16xf32> to vector<16x1xf32>
    %48 = vector.broadcast %47 : vector<16x1xf32> to vector<16x16xf32>
    %49 = arith.subf %45, %48 : vector<16x16xf32>
    %50 = math.exp %49 : vector<16x16xf32>
    %cst_24 = arith.constant dense<0.000000e+00> : vector<16xf32>
    %51 = vector.multi_reduction <add>, %50, %cst_24 [1] : vector<16x16xf32> to vector<16xf32>
    %52 = vector.shape_cast %51 : vector<16xf32> to vector<16x1xf32>
    %53 = tpu.reciprocal %52 {approx = true} : vector<16x1xf32> -> vector<16x1xf32>
    %54 = vector.broadcast %53 : vector<16x1xf32> to vector<16x16xf32>
    %55 = arith.mulf %50, %54 : vector<16x16xf32>
    %cst_25 = arith.constant dense<0.000000e+00> : vector<16x16xf32>
    %56 = tpu.matmul %55, %41, %cst_25 {dimension_numbers = #tpu.dot_dimension_numbers<[1], [0], [0], [1], [0, 0, 1, 1], [], []>} : vector<16x16xf32>, vector<16x16xf32>, vector<16x16xf32> -> vector<16x16xf32>
    %57 = vector.extract_strided_slice %38 {offsets = [0, 16], sizes = [16, 16], strides = [1, 1]} : vector<16x96xf32> to vector<16x16xf32>
    %58 = vector.extract_strided_slice %38 {offsets = [0, 48], sizes = [16, 16], strides = [1, 1]} : vector<16x96xf32> to vector<16x16xf32>
    %59 = vector.extract_strided_slice %38 {offsets = [0, 80], sizes = [16, 16], strides = [1, 1]} : vector<16x96xf32> to vector<16x16xf32>
    %cst_26 = arith.constant dense<0.000000e+00> : vector<16x16xf32>
    %60 = tpu.matmul %57, %58, %cst_26 {dimension_numbers = #tpu.dot_dimension_numbers<[1], [1], [0], [0], [0, 0, 1, 0], [], []>} : vector<16x16xf32>, vector<16x16xf32>, vector<16x16xf32> -> vector<16x16xf32>
    %cst_27 = arith.constant 2.500000e-01 : f32
    %61 = vector.broadcast %cst_27 : f32 to vector<16x16xf32>
    %62 = arith.mulf %60, %61 : vector<16x16xf32>
    %63 = arith.addf %62, %15 : vector<16x16xf32>
    %cst_28 = arith.constant dense<0xFF800000> : vector<16xf32>
    %64 = vector.multi_reduction <maximumf>, %63, %cst_28 [1] : vector<16x16xf32> to vector<16xf32>
    %65 = vector.shape_cast %64 : vector<16xf32> to vector<16x1xf32>
    %66 = vector.broadcast %65 : vector<16x1xf32> to vector<16x16xf32>
    %67 = arith.subf %63, %66 : vector<16x16xf32>
    %68 = math.exp %67 : vector<16x16xf32>
    %cst_29 = arith.constant dense<0.000000e+00> : vector<16xf32>
    %69 = vector.multi_reduction <add>, %68, %cst_29 [1] : vector<16x16xf32> to vector<16xf32>
    %70 = vector.shape_cast %69 : vector<16xf32> to vector<16x1xf32>
    %71 = tpu.reciprocal %70 {approx = true} : vector<16x1xf32> -> vector<16x1xf32>
    %72 = vector.broadcast %71 : vector<16x1xf32> to vector<16x16xf32>
    %73 = arith.mulf %68, %72 : vector<16x16xf32>
    %cst_30 = arith.constant dense<0.000000e+00> : vector<16x16xf32>
    %74 = tpu.matmul %73, %59, %cst_30 {dimension_numbers = #tpu.dot_dimension_numbers<[1], [0], [0], [1], [0, 0, 1, 1], [], []>} : vector<16x16xf32>, vector<16x16xf32>, vector<16x16xf32> -> vector<16x16xf32>
    %75 = tpu.concatenate %56, %74 in 1 : vector<16x16xf32>, vector<16x16xf32> -> vector<16x32xf32>
    %cst_31 = arith.constant dense<0.000000e+00> : vector<16x32xf32>
    %76 = tpu.matmul %75, %29, %cst_31 {dimension_numbers = #tpu.dot_dimension_numbers<[1], [0], [0], [1], [0, 0, 1, 1], [], []>} : vector<16x32xf32>, vector<32x32xf32>, vector<16x32xf32> -> vector<16x32xf32>
    %77 = arith.addf %76, %27 : vector<16x32xf32>
    %cst_32 = arith.constant dense<0.000000e+00> : vector<16xf32>
    %78 = vector.multi_reduction <add>, %77, %cst_32 [1] : vector<16x32xf32> to vector<16xf32>
    %79 = vector.shape_cast %78 : vector<16xf32> to vector<16x1xf32>
    %cst_33 = arith.constant 3.200000e+01 : f32
    %80 = vector.broadcast %cst_33 : f32 to vector<16x1xf32>
    %81 = arith.divf %79, %80 : vector<16x1xf32>
    %82 = vector.broadcast %81 : vector<16x1xf32> to vector<16x32xf32>
    %83 = arith.subf %77, %82 : vector<16x32xf32>
    %84 = arith.mulf %83, %83 : vector<16x32xf32>
    %cst_34 = arith.constant dense<0.000000e+00> : vector<16xf32>
    %85 = vector.multi_reduction <add>, %84, %cst_34 [1] : vector<16x32xf32> to vector<16xf32>
    %86 = vector.shape_cast %85 : vector<16xf32> to vector<16x1xf32>
    %cst_35 = arith.constant 3.200000e+01 : f32
    %87 = vector.broadcast %cst_35 : f32 to vector<16x1xf32>
    %88 = arith.divf %86, %87 : vector<16x1xf32>
    %89 = vector.broadcast %81 : vector<16x1xf32> to vector<16x32xf32>
    %90 = arith.subf %77, %89 : vector<16x32xf32>
    %cst_36 = arith.constant 9.99999974E-6 : f32
    %91 = vector.broadcast %cst_36 : f32 to vector<16x1xf32>
    %92 = arith.addf %88, %91 : vector<16x1xf32>
    %93 = math.rsqrt %92 : vector<16x1xf32>
    %94 = vector.broadcast %93 : vector<16x1xf32> to vector<16x32xf32>
    %95 = arith.mulf %90, %94 : vector<16x32xf32>
    %96 = vector.broadcast %34 : vector<1x32xf32> to vector<16x32xf32>
    %97 = arith.mulf %95, %96 : vector<16x32xf32>
    %98 = vector.broadcast %35 : vector<1x32xf32> to vector<16x32xf32>
    %99 = arith.addf %97, %98 : vector<16x32xf32>
    %cst_37 = arith.constant dense<0.000000e+00> : vector<16x64xf32>
    %100 = tpu.matmul %99, %30, %cst_37 {dimension_numbers = #tpu.dot_dimension_numbers<[1], [0], [0], [1], [0, 0, 1, 1], [], []>} : vector<16x32xf32>, vector<32x64xf32>, vector<16x64xf32> -> vector<16x64xf32>
    %101 = vector.broadcast %32 : vector<1x64xf32> to vector<16x64xf32>
    %102 = arith.addf %100, %101 : vector<16x64xf32>
    %cst_38 = arith.constant 0.000000e+00 : f32
    %103 = vector.broadcast %cst_38 : f32 to vector<16x64xf32>
    %104 = arith.maximumf %102, %103 : vector<16x64xf32>
    %cst_39 = arith.constant dense<0.000000e+00> : vector<16x32xf32>
    %105 = tpu.matmul %104, %31, %cst_39 {dimension_numbers = #tpu.dot_dimension_numbers<[1], [0], [0], [1], [0, 0, 1, 1], [], []>} : vector<16x64xf32>, vector<64x32xf32>, vector<16x32xf32> -> vector<16x32xf32>
    %106 = vector.broadcast %33 : vector<1x32xf32> to vector<16x32xf32>
    %107 = arith.addf %105, %106 : vector<16x32xf32>
    %108 = arith.addf %107, %99 : vector<16x32xf32>
    %cst_40 = arith.constant dense<0.000000e+00> : vector<16xf32>
    %109 = vector.multi_reduction <add>, %108, %cst_40 [1] : vector<16x32xf32> to vector<16xf32>
    %110 = vector.shape_cast %109 : vector<16xf32> to vector<16x1xf32>
    %cst_41 = arith.constant 3.200000e+01 : f32
    %111 = vector.broadcast %cst_41 : f32 to vector<16x1xf32>
    %112 = arith.divf %110, %111 : vector<16x1xf32>
    %113 = vector.broadcast %112 : vector<16x1xf32> to vector<16x32xf32>
    %114 = arith.subf %108, %113 : vector<16x32xf32>
    %115 = arith.mulf %114, %114 : vector<16x32xf32>
    %cst_42 = arith.constant dense<0.000000e+00> : vector<16xf32>
    %116 = vector.multi_reduction <add>, %115, %cst_42 [1] : vector<16x32xf32> to vector<16xf32>
    %117 = vector.shape_cast %116 : vector<16xf32> to vector<16x1xf32>
    %cst_43 = arith.constant 3.200000e+01 : f32
    %118 = vector.broadcast %cst_43 : f32 to vector<16x1xf32>
    %119 = arith.divf %117, %118 : vector<16x1xf32>
    %120 = vector.broadcast %112 : vector<16x1xf32> to vector<16x32xf32>
    %121 = arith.subf %108, %120 : vector<16x32xf32>
    %cst_44 = arith.constant 9.99999974E-6 : f32
    %122 = vector.broadcast %cst_44 : f32 to vector<16x1xf32>
    %123 = arith.addf %119, %122 : vector<16x1xf32>
    %124 = math.rsqrt %123 : vector<16x1xf32>
    %125 = vector.broadcast %124 : vector<16x1xf32> to vector<16x32xf32>
    %126 = arith.mulf %121, %125 : vector<16x32xf32>
    %127 = vector.broadcast %36 : vector<1x32xf32> to vector<16x32xf32>
    %128 = arith.mulf %126, %127 : vector<16x32xf32>
    %129 = vector.broadcast %37 : vector<1x32xf32> to vector<16x32xf32>
    %130 = arith.addf %128, %129 : vector<16x32xf32>
    %c224 = arith.constant 224 : index
    %c0_45 = arith.constant 0 : index
    %131 = vector.load %arg1[%c224, %c0_45] : memref<384x128xf32, #tpu.memory_space<vmem>>, vector<32x96xf32>
    %c256 = arith.constant 256 : index
    %c0_46 = arith.constant 0 : index
    %132 = vector.load %arg1[%c256, %c0_46] : memref<384x128xf32, #tpu.memory_space<vmem>>, vector<32x32xf32>
    %c288 = arith.constant 288 : index
    %c0_47 = arith.constant 0 : index
    %133 = vector.load %arg1[%c288, %c0_47] : memref<384x128xf32, #tpu.memory_space<vmem>>, vector<32x64xf32>
    %c320 = arith.constant 320 : index
    %c0_48 = arith.constant 0 : index
    %134 = vector.load %arg1[%c320, %c0_48] : memref<384x128xf32, #tpu.memory_space<vmem>>, vector<64x32xf32>
    %c32 = arith.constant 32 : index
    %c0_49 = arith.constant 0 : index
    %135 = vector.load %arg2[%c32, %c0_49] : memref<40x128xf32, #tpu.memory_space<vmem>>, vector<1x64xf32>
    %c33 = arith.constant 33 : index
    %c0_50 = arith.constant 0 : index
    %136 = vector.load %arg2[%c33, %c0_50] : memref<40x128xf32, #tpu.memory_space<vmem>>, vector<1x32xf32>
    %c34 = arith.constant 34 : index
    %c0_51 = arith.constant 0 : index
    %137 = vector.load %arg2[%c34, %c0_51] : memref<40x128xf32, #tpu.memory_space<vmem>>, vector<1x32xf32>
    %c35 = arith.constant 35 : index
    %c0_52 = arith.constant 0 : index
    %138 = vector.load %arg2[%c35, %c0_52] : memref<40x128xf32, #tpu.memory_space<vmem>>, vector<1x32xf32>
    %c36 = arith.constant 36 : index
    %c0_53 = arith.constant 0 : index
    %139 = vector.load %arg2[%c36, %c0_53] : memref<40x128xf32, #tpu.memory_space<vmem>>, vector<1x32xf32>
    %c37 = arith.constant 37 : index
    %c0_54 = arith.constant 0 : index
    %140 = vector.load %arg2[%c37, %c0_54] : memref<40x128xf32, #tpu.memory_space<vmem>>, vector<1x32xf32>
    %cst_55 = arith.constant dense<0.000000e+00> : vector<16x96xf32>
    %141 = tpu.matmul %130, %131, %cst_55 {dimension_numbers = #tpu.dot_dimension_numbers<[1], [0], [0], [1], [0, 0, 1, 1], [], []>} : vector<16x32xf32>, vector<32x96xf32>, vector<16x96xf32> -> vector<16x96xf32>
    %142 = vector.extract_strided_slice %141 {offsets = [0, 0], sizes = [16, 16], strides = [1, 1]} : vector<16x96xf32> to vector<16x16xf32>
    %143 = vector.extract_strided_slice %141 {offsets = [0, 32], sizes = [16, 16], strides = [1, 1]} : vector<16x96xf32> to vector<16x16xf32>
    %144 = vector.extract_strided_slice %141 {offsets = [0, 64], sizes = [16, 16], strides = [1, 1]} : vector<16x96xf32> to vector<16x16xf32>
    %cst_56 = arith.constant dense<0.000000e+00> : vector<16x16xf32>
    %145 = tpu.matmul %142, %143, %cst_56 {dimension_numbers = #tpu.dot_dimension_numbers<[1], [1], [0], [0], [0, 0, 1, 0], [], []>} : vector<16x16xf32>, vector<16x16xf32>, vector<16x16xf32> -> vector<16x16xf32>
    %cst_57 = arith.constant 2.500000e-01 : f32
    %146 = vector.broadcast %cst_57 : f32 to vector<16x16xf32>
    %147 = arith.mulf %145, %146 : vector<16x16xf32>
    %148 = arith.addf %147, %15 : vector<16x16xf32>
    %cst_58 = arith.constant dense<0xFF800000> : vector<16xf32>
    %149 = vector.multi_reduction <maximumf>, %148, %cst_58 [1] : vector<16x16xf32> to vector<16xf32>
    %150 = vector.shape_cast %149 : vector<16xf32> to vector<16x1xf32>
    %151 = vector.broadcast %150 : vector<16x1xf32> to vector<16x16xf32>
    %152 = arith.subf %148, %151 : vector<16x16xf32>
    %153 = math.exp %152 : vector<16x16xf32>
    %cst_59 = arith.constant dense<0.000000e+00> : vector<16xf32>
    %154 = vector.multi_reduction <add>, %153, %cst_59 [1] : vector<16x16xf32> to vector<16xf32>
    %155 = vector.shape_cast %154 : vector<16xf32> to vector<16x1xf32>
    %156 = tpu.reciprocal %155 {approx = true} : vector<16x1xf32> -> vector<16x1xf32>
    %157 = vector.broadcast %156 : vector<16x1xf32> to vector<16x16xf32>
    %158 = arith.mulf %153, %157 : vector<16x16xf32>
    %cst_60 = arith.constant dense<0.000000e+00> : vector<16x16xf32>
    %159 = tpu.matmul %158, %144, %cst_60 {dimension_numbers = #tpu.dot_dimension_numbers<[1], [0], [0], [1], [0, 0, 1, 1], [], []>} : vector<16x16xf32>, vector<16x16xf32>, vector<16x16xf32> -> vector<16x16xf32>
    %160 = vector.extract_strided_slice %141 {offsets = [0, 16], sizes = [16, 16], strides = [1, 1]} : vector<16x96xf32> to vector<16x16xf32>
    %161 = vector.extract_strided_slice %141 {offsets = [0, 48], sizes = [16, 16], strides = [1, 1]} : vector<16x96xf32> to vector<16x16xf32>
    %162 = vector.extract_strided_slice %141 {offsets = [0, 80], sizes = [16, 16], strides = [1, 1]} : vector<16x96xf32> to vector<16x16xf32>
    %cst_61 = arith.constant dense<0.000000e+00> : vector<16x16xf32>
    %163 = tpu.matmul %160, %161, %cst_61 {dimension_numbers = #tpu.dot_dimension_numbers<[1], [1], [0], [0], [0, 0, 1, 0], [], []>} : vector<16x16xf32>, vector<16x16xf32>, vector<16x16xf32> -> vector<16x16xf32>
    %cst_62 = arith.constant 2.500000e-01 : f32
    %164 = vector.broadcast %cst_62 : f32 to vector<16x16xf32>
    %165 = arith.mulf %163, %164 : vector<16x16xf32>
    %166 = arith.addf %165, %15 : vector<16x16xf32>
    %cst_63 = arith.constant dense<0xFF800000> : vector<16xf32>
    %167 = vector.multi_reduction <maximumf>, %166, %cst_63 [1] : vector<16x16xf32> to vector<16xf32>
    %168 = vector.shape_cast %167 : vector<16xf32> to vector<16x1xf32>
    %169 = vector.broadcast %168 : vector<16x1xf32> to vector<16x16xf32>
    %170 = arith.subf %166, %169 : vector<16x16xf32>
    %171 = math.exp %170 : vector<16x16xf32>
    %cst_64 = arith.constant dense<0.000000e+00> : vector<16xf32>
    %172 = vector.multi_reduction <add>, %171, %cst_64 [1] : vector<16x16xf32> to vector<16xf32>
    %173 = vector.shape_cast %172 : vector<16xf32> to vector<16x1xf32>
    %174 = tpu.reciprocal %173 {approx = true} : vector<16x1xf32> -> vector<16x1xf32>
    %175 = vector.broadcast %174 : vector<16x1xf32> to vector<16x16xf32>
    %176 = arith.mulf %171, %175 : vector<16x16xf32>
    %cst_65 = arith.constant dense<0.000000e+00> : vector<16x16xf32>
    %177 = tpu.matmul %176, %162, %cst_65 {dimension_numbers = #tpu.dot_dimension_numbers<[1], [0], [0], [1], [0, 0, 1, 1], [], []>} : vector<16x16xf32>, vector<16x16xf32>, vector<16x16xf32> -> vector<16x16xf32>
    %178 = tpu.concatenate %159, %177 in 1 : vector<16x16xf32>, vector<16x16xf32> -> vector<16x32xf32>
    %cst_66 = arith.constant dense<0.000000e+00> : vector<16x32xf32>
    %179 = tpu.matmul %178, %132, %cst_66 {dimension_numbers = #tpu.dot_dimension_numbers<[1], [0], [0], [1], [0, 0, 1, 1], [], []>} : vector<16x32xf32>, vector<32x32xf32>, vector<16x32xf32> -> vector<16x32xf32>
    %180 = arith.addf %179, %130 : vector<16x32xf32>
    %cst_67 = arith.constant dense<0.000000e+00> : vector<16xf32>
    %181 = vector.multi_reduction <add>, %180, %cst_67 [1] : vector<16x32xf32> to vector<16xf32>
    %182 = vector.shape_cast %181 : vector<16xf32> to vector<16x1xf32>
    %cst_68 = arith.constant 3.200000e+01 : f32
    %183 = vector.broadcast %cst_68 : f32 to vector<16x1xf32>
    %184 = arith.divf %182, %183 : vector<16x1xf32>
    %185 = vector.broadcast %184 : vector<16x1xf32> to vector<16x32xf32>
    %186 = arith.subf %180, %185 : vector<16x32xf32>
    %187 = arith.mulf %186, %186 : vector<16x32xf32>
    %cst_69 = arith.constant dense<0.000000e+00> : vector<16xf32>
    %188 = vector.multi_reduction <add>, %187, %cst_69 [1] : vector<16x32xf32> to vector<16xf32>
    %189 = vector.shape_cast %188 : vector<16xf32> to vector<16x1xf32>
    %cst_70 = arith.constant 3.200000e+01 : f32
    %190 = vector.broadcast %cst_70 : f32 to vector<16x1xf32>
    %191 = arith.divf %189, %190 : vector<16x1xf32>
    %192 = vector.broadcast %184 : vector<16x1xf32> to vector<16x32xf32>
    %193 = arith.subf %180, %192 : vector<16x32xf32>
    %cst_71 = arith.constant 9.99999974E-6 : f32
    %194 = vector.broadcast %cst_71 : f32 to vector<16x1xf32>
    %195 = arith.addf %191, %194 : vector<16x1xf32>
    %196 = math.rsqrt %195 : vector<16x1xf32>
    %197 = vector.broadcast %196 : vector<16x1xf32> to vector<16x32xf32>
    %198 = arith.mulf %193, %197 : vector<16x32xf32>
    %199 = vector.broadcast %137 : vector<1x32xf32> to vector<16x32xf32>
    %200 = arith.mulf %198, %199 : vector<16x32xf32>
    %201 = vector.broadcast %138 : vector<1x32xf32> to vector<16x32xf32>
    %202 = arith.addf %200, %201 : vector<16x32xf32>
    %cst_72 = arith.constant dense<0.000000e+00> : vector<16x64xf32>
    %203 = tpu.matmul %202, %133, %cst_72 {dimension_numbers = #tpu.dot_dimension_numbers<[1], [0], [0], [1], [0, 0, 1, 1], [], []>} : vector<16x32xf32>, vector<32x64xf32>, vector<16x64xf32> -> vector<16x64xf32>
    %204 = vector.broadcast %135 : vector<1x64xf32> to vector<16x64xf32>
    %205 = arith.addf %203, %204 : vector<16x64xf32>
    %cst_73 = arith.constant 0.000000e+00 : f32
    %206 = vector.broadcast %cst_73 : f32 to vector<16x64xf32>
    %207 = arith.maximumf %205, %206 : vector<16x64xf32>
    %cst_74 = arith.constant dense<0.000000e+00> : vector<16x32xf32>
    %208 = tpu.matmul %207, %134, %cst_74 {dimension_numbers = #tpu.dot_dimension_numbers<[1], [0], [0], [1], [0, 0, 1, 1], [], []>} : vector<16x64xf32>, vector<64x32xf32>, vector<16x32xf32> -> vector<16x32xf32>
    %209 = vector.broadcast %136 : vector<1x32xf32> to vector<16x32xf32>
    %210 = arith.addf %208, %209 : vector<16x32xf32>
    %211 = arith.addf %210, %202 : vector<16x32xf32>
    %cst_75 = arith.constant dense<0.000000e+00> : vector<16xf32>
    %212 = vector.multi_reduction <add>, %211, %cst_75 [1] : vector<16x32xf32> to vector<16xf32>
    %213 = vector.shape_cast %212 : vector<16xf32> to vector<16x1xf32>
    %cst_76 = arith.constant 3.200000e+01 : f32
    %214 = vector.broadcast %cst_76 : f32 to vector<16x1xf32>
    %215 = arith.divf %213, %214 : vector<16x1xf32>
    %216 = vector.broadcast %215 : vector<16x1xf32> to vector<16x32xf32>
    %217 = arith.subf %211, %216 : vector<16x32xf32>
    %218 = arith.mulf %217, %217 : vector<16x32xf32>
    %cst_77 = arith.constant dense<0.000000e+00> : vector<16xf32>
    %219 = vector.multi_reduction <add>, %218, %cst_77 [1] : vector<16x32xf32> to vector<16xf32>
    %220 = vector.shape_cast %219 : vector<16xf32> to vector<16x1xf32>
    %cst_78 = arith.constant 3.200000e+01 : f32
    %221 = vector.broadcast %cst_78 : f32 to vector<16x1xf32>
    %222 = arith.divf %220, %221 : vector<16x1xf32>
    %223 = vector.broadcast %215 : vector<16x1xf32> to vector<16x32xf32>
    %224 = arith.subf %211, %223 : vector<16x32xf32>
    %cst_79 = arith.constant 9.99999974E-6 : f32
    %225 = vector.broadcast %cst_79 : f32 to vector<16x1xf32>
    %226 = arith.addf %222, %225 : vector<16x1xf32>
    %227 = math.rsqrt %226 : vector<16x1xf32>
    %228 = vector.broadcast %227 : vector<16x1xf32> to vector<16x32xf32>
    %229 = arith.mulf %224, %228 : vector<16x32xf32>
    %230 = vector.broadcast %139 : vector<1x32xf32> to vector<16x32xf32>
    %231 = arith.mulf %229, %230 : vector<16x32xf32>
    %232 = vector.broadcast %140 : vector<1x32xf32> to vector<16x32xf32>
    %233 = arith.addf %231, %232 : vector<16x32xf32>
    %c32_80 = arith.constant 32 : index
    %c0_81 = arith.constant 0 : index
    %234 = vector.load %arg1[%c32_80, %c0_81] : memref<384x128xf32, #tpu.memory_space<vmem>>, vector<32x128xf32>
    %c16 = arith.constant 16 : index
    %c0_82 = arith.constant 0 : index
    %235 = vector.load %arg2[%c16, %c0_82] : memref<40x128xf32, #tpu.memory_space<vmem>>, vector<1x128xf32>
    %cst_83 = arith.constant dense<0.000000e+00> : vector<16x128xf32>
    %236 = tpu.matmul %233, %234, %cst_83 {dimension_numbers = #tpu.dot_dimension_numbers<[1], [0], [0], [1], [0, 0, 1, 1], [], []>} : vector<16x32xf32>, vector<32x128xf32>, vector<16x128xf32> -> vector<16x128xf32>
    %237 = vector.broadcast %235 : vector<1x128xf32> to vector<16x128xf32>
    %238 = arith.addf %236, %237 : vector<16x128xf32>
    %cst_84 = arith.constant dense<0xFF800000> : vector<16xf32>
    %239 = vector.multi_reduction <maximumf>, %238, %cst_84 [1] : vector<16x128xf32> to vector<16xf32>
    %240 = vector.shape_cast %239 : vector<16xf32> to vector<16x1xf32>
    %241 = vector.broadcast %240 : vector<16x1xf32> to vector<16x128xf32>
    %242 = arith.subf %238, %241 : vector<16x128xf32>
    %243 = math.exp %242 : vector<16x128xf32>
    %cst_85 = arith.constant dense<0.000000e+00> : vector<16xf32>
    %244 = vector.multi_reduction <add>, %243, %cst_85 [1] : vector<16x128xf32> to vector<16xf32>
    %245 = vector.shape_cast %244 : vector<16xf32> to vector<16x1xf32>
    %246 = math.log %245 : vector<16x1xf32>
    %247 = vector.broadcast %246 : vector<16x1xf32> to vector<16x128xf32>
    %248 = arith.subf %242, %247 : vector<16x128xf32>
    %c0_86 = arith.constant 0 : index
    %c0_87 = arith.constant 0 : index
    %249 = vector.load %arg3[%c0_86, %c0_87] : memref<16x128xf32, #tpu.memory_space<vmem>>, vector<16x128xf32>
    tpu.vector_store %arg3[%c0_86, %c0_87], %248 {strides = array<i32>} : memref<16x128xf32, #tpu.memory_space<vmem>>, vector<16x128xf32>,
    return
  }
}

</mosaic_0001>

<llo_original>
// kernel: transformer_forward.1
$region0: #{transformer_forward.1}
  #allocation0 [shape = 'u32[]', space=smem, size = 0x4, offset = 0x4, fixed_abs, tag = 'smem constant byte address 0x4 - core index']
  #allocation1 [shape = 'u32[144,128]{1,0:T(1,128)}', space=vmem, size = 0x12000, scoped, tag = 'internal scratch']
  %s0 = inlined_call_operand.vmem [shape: s32[16,1], index: 0, kind: input, shape index: {}]
  %s1 = inlined_call_operand.hbm [shape: f32[384,128], index: 1, kind: input, shape index: {}]
  %s2 = inlined_call_operand.hbm [shape: f32[40,128], index: 2, kind: input, shape index: {}]
  %s3 = inlined_call_operand.vmem [shape: f32[16,128], index: 3, kind: output, shape index: {}]
  %s4 = sld [smem:[#allocation0]]
  $region30: #{transformer_forward.1} parent=0
    _
  %s6 = ssub.s32 1, %s4
  %s7 = scalar_select 0, %s6, %s4
  $region1: #{transformer_forward.1} parent=0
    #allocation2 [shape = 'u8[196608]{0}', space=vmem, size = 0x30000, scoped, tag = 'input window, operand 1, single buffered']
    #allocation3 [shape = 's32[1]{0}', space=sflag, size = 0x4, scoped, tag = 'scoped memory for transformer_forward.1']
    #allocation4 [shape = 'u8[20480]{0}', space=vmem, size = 0x5000, scoped, tag = 'input window, operand 2, single buffered']
    #allocation5 [shape = 's32[1]{0}', space=sflag, size = 0x4, scoped, tag = 'scoped memory for transformer_forward.1']
    %8 = vsyncpa [#allocation3], 0
    %9 = vsyncpa [#allocation5], 0
    // Predicated region
    $region2: #{transformer_forward.1} parent=1 // pred_check
      _
    $region3: #{transformer_forward.1} parent=1 // pred_check_branch
      %11 = sbr.rel (0) target = $region5
    $region4: #{transformer_forward.1} parent=1 // pred_region
      _
    $region5: #{transformer_forward.1} parent=1 // pred_fallthru
      _
    // Predicated region
    $region6: #{transformer_forward.1} parent=1 // pred_check
      _
    $region7: #{transformer_forward.1} parent=1 // pred_check_branch
      %13 = sbr.rel (0) target = $region9
    $region8: #{transformer_forward.1} parent=1 // pred_region
      %s15 = ssub.s32 6144, 6144
      %16 = vsyncadd [#allocation3], %s15
      %s17 = sshll.u32 [#allocation2], 4
      %s18 = int_to_ptr.vmem [resolvable:$true] %s17
      %23 = dma.hbm_to_vmem [thread:$0]  %s1, 6144, %s18, [#allocation3], 128, 128, 8
    $region9: #{transformer_forward.1} parent=1 // pred_fallthru
      _
    // Predicated region
    $region10: #{transformer_forward.1} parent=1 // pred_check
      _
    $region11: #{transformer_forward.1} parent=1 // pred_check_branch
      %25 = sbr.rel (0) target = $region13
    $region12: #{transformer_forward.1} parent=1 // pred_region
      %s27 = ssub.s32 640, 640
      %28 = vsyncadd [#allocation5], %s27
      %s29 = sshll.u32 [#allocation4], 4
      %s30 = int_to_ptr.vmem [resolvable:$true] %s29
      %35 = dma.hbm_to_vmem [thread:$0]  %s2, 640, %s30, [#allocation5], 128, 128, 8
    $region13: #{transformer_forward.1} parent=1 // pred_fallthru
      _
    // Predicated region
    $region14: #{transformer_forward.1} parent=1 // pred_check
      _
    $region15: #{transformer_forward.1} parent=1 // pred_check_branch
      %37 = sbr.rel (0) target = $region17
    $region16: #{transformer_forward.1} parent=1 // pred_region
      %38 = dma.done [#allocation3], 6144
    $region17: #{transformer_forward.1} parent=1 // pred_fallthru
      _
    // Predicated region
    $region18: #{transformer_forward.1} parent=1 // pred_check
      _
    $region19: #{transformer_forward.1} parent=1 // pred_check_branch
      %40 = sbr.rel (0) target = $region21
    $region20: #{transformer_forward.1} parent=1 // pred_region
      %41 = dma.done [#allocation5], 640
    $region21: #{transformer_forward.1} parent=1 // pred_fallthru
      _
    %v42 = vlaneseq
    %v43 = vshrl.u32 %v42, 7
    %v44 = vadd.s32 %v43, 8
    %v45 = vlaneseq
    %v46 = vand.u32 %v45, 127
    %v47 = vshra.s32 %v43, 3
    %v48 = vshra.s32 %v44, 3
    %v49 = vshra.s32 %v46, 3
    %vm50 = vcmp.eq.s32.totalorder %v47, %v49
    %vm51 = vcmp.eq.s32.totalorder %v48, %v49
    %v52 = vand.u32 %v43, 7
    %v53 = vand.u32 %v44, 7
    %v54 = vand.u32 %v46, 7
    %vm55 = vcmp.ge.s32.totalorder %v52, %v54
    %vm56 = vcmp.ge.s32.totalorder %v53, %v54
    %vm57 = vmand %vm50, %vm55
    %vm58 = vmand %vm51, %vm56
    %v59 = vsel %vm57, 0.0, -1e+30
    %v60 = vsel %vm58, 0.0, -1e+30
    %v61 = vld [vmem:[%s0] sm:$0xff]
    %v62 = vld [vmem:[%s0 + $0x8] sm:$0xff]
    %63 = vset.pattern.permute.xlu0 0
    %64 = vperm.xlu0 %63, %v61
    %v65 = vpop.permute.xlu0 %64
    %66 = vset.pattern.permute.xlu0 0
    %67 = vperm.xlu0 %66, %v62
    %v68 = vpop.permute.xlu0 %67
    %vm69 = vcmp.eq.s32.totalorder %v65, %v46
    %vm70 = vcmp.eq.s32.totalorder %v68, %v46
    %v71 = vsel %vm69, 1, 0
    %v72 = vsel %vm70, 1, 0
    %v73 = vcvt.s32.f32 %v71
    %v74 = vcvt.s32.f32 %v72
    %v75 = vld [vmem:[#allocation2] sm:$0xff]
    %v76 = vld [vmem:[#allocation2 + $0x8] sm:$0xff]
    %v77 = vld [vmem:[#allocation2 + $0x10] sm:$0xff]
    %v78 = vld [vmem:[#allocation2 + $0x18] sm:$0xff]
    %v79 = vld [vmem:[#allocation4] sm:$0xff]
    %v80 = vld [vmem:[#allocation4 + $0x8] sm:$0xff]
    %vm81 = vcmask 261120
    %v83 = vsel %vm81, %v73, 0
    %v86 = vsel %vm81, %v74, 0
    %88 = vmatprep.subr.mxu0 0.0
    %89 = vmatpush1.msra.mxu0 %v75
    %90 = vmatprep.subr.mxu0 0.0
    %91 = vmatpush1.msra.mxu0 %v76
    %92 = vmatprep.subr.mxu0 0.0
    %93 = vmatpush1.msra.mxu0 %v77
    %94 = vmatprep.subr.mxu0 0.0
    %95 = vmatpush1.msra.mxu0 %v78
    %96 = vmatprep.subr.mxu0 0.0
    %97 = vmatpush1.msra.mxu0 0.0
    %98 = vmatprep.subr.mxu0 0.0
    %99 = vmatpush1.msra.mxu0 0.0
    %100 = vmatprep.subr.mxu0 0.0
    %101 = vmatpush1.msra.mxu0 0.0
    %102 = vmatprep.subr.mxu0 0.0
    %103 = vmatpush1.msra.mxu0 0.0
    %104 = vmatprep.subr.mxu0 0.0
    %105 = vmatpush1.msra.mxu0 0.0
    %106 = vmatprep.subr.mxu0 0.0
    %107 = vmatpush1.msra.mxu0 0.0
    %108 = vmatprep.subr.mxu0 0.0
    %109 = vmatpush1.msra.mxu0 0.0
    %110 = vmatprep.subr.mxu0 0.0
    %111 = vmatpush1.msra.mxu0 0.0
    %112 = vmatprep.subr.mxu0 0.0
    %113 = vmatpush1.msra.mxu0 0.0
    %114 = vmatprep.subr.mxu0 0.0
    %115 = vmatpush1.msra.mxu0 0.0
    %116 = vmatprep.subr.mxu0 0.0
    %117 = vmatpush1.msra.mxu0 0.0
    %118 = vmatprep.subr.mxu0 0.0
    %119 = vmatpush1.msra.mxu0 0.0
    %120 = vmatprep.subr.mxu0 0.0
    %121 = vmatpush1.msra.mxu0 0.0
    %122 = vmatprep.subr.mxu0 0.0
    %123 = vmatpush1.msra.mxu0 0.0
    %124 = vmatprep.subr.mxu0 0.0
    %125 = vmatpush1.msra.mxu0 0.0
    %126 = vmatprep.subr.mxu0 0.0
    %127 = vmatpush1.msra.mxu0 0.0
    %128 = vmatprep.subr.mxu0 0.0
    %129 = vmatpush1.msra.mxu0 0.0
    %130 = vmatprep.subr.mxu0 0.0
    %131 = vmatpush1.msra.mxu0 0.0
    %132 = vmatprep.subr.mxu0 0.0
    %133 = vmatpush1.msra.mxu0 0.0
    %134 = vmatprep.subr.mxu0 0.0
    %135 = vmatpush1.msra.mxu0 0.0
    %136 = vmatprep.subr.mxu0 0.0
    %137 = vmatpush1.msra.mxu0 0.0
    %138 = vmatprep.subr.mxu0 0.0
    %139 = vmatpush1.msra.mxu0 0.0
    %140 = vmatprep.subr.mxu0 0.0
    %141 = vmatpush1.msra.mxu0 0.0
    %142 = vmatprep.subr.mxu0 0.0
    %143 = vmatpush1.msra.mxu0 0.0
    %144 = vmatprep.subr.mxu0 0.0
    %145 = vmatpush1.msra.mxu0 0.0
    %146 = vmatprep.subr.mxu0 0.0
    %147 = vmatpush1.msra.mxu0 0.0
    %148 = vmatprep.subr.mxu0 0.0
    %149 = vmatpush1.msra.mxu0 0.0
    %150 = vmatprep.subr.mxu0 0.0
    %151 = vmatpush1.msra.mxu0 0.0
    %152 = vmatprep.mubr.f32.mxu0 0.0
    %153 = vmatmul.mubr.f32.gmra.mrb[0].mxu0 %v83
    %v154 = vpop.f32.mrb[0].mxu0
    %v155 = vadd.f32 %v79, %v154
    %v156 = vpop.f32.mrb[0].mxu0
    %157 = vmatprep.mubr.f32.mxu0 0.0
    %158 = vmatmul.mubr.f32.gmra.mrb[0].mxu0 %v86
    %v159 = vpop.f32.mrb[0].mxu0
    %v160 = vadd.f32 %v80, %v159
    %v161 = vpop.f32.mrb[0].mxu0
    %162 = vdwg.mxu0
    %v163 = vmax.f32 %v155, 0.0
    %v164 = vmax.f32 %v160, 0.0
    %v165 = vld [vmem:[#allocation2 + $0x40] sm:$0xff]
    %v166 = vld [vmem:[#allocation2 + $0x48] sm:$0xff]
    %v167 = vld [vmem:[#allocation2 + $0x50] sm:$0xff]
    %v168 = vld [vmem:[#allocation2 + $0x58] sm:$0xff]
    %v169 = vld [vmem:[#allocation2 + $0x60] sm:$0xff]
    %v170 = vld [vmem:[#allocation2 + $0x68] sm:$0xff]
    %v171 = vld [vmem:[#allocation2 + $0x70] sm:$0xff]
    %v172 = vld [vmem:[#allocation2 + $0x78] sm:$0xff]
    %v173 = vld [vmem:[#allocation2 + $0x80] sm:$0xff]
    %v174 = vld [vmem:[#allocation2 + $0x88] sm:$0xff]
    %v175 = vld [vmem:[#allocation2 + $0x90] sm:$0xff]
    %v176 = vld [vmem:[#allocation2 + $0x98] sm:$0xff]
    %v177 = vld [vmem:[#allocation2 + $0xa0] sm:$0xff]
    %v178 = vld [vmem:[#allocation2 + $0xa8] sm:$0xff]
    %v179 = vld [vmem:[#allocation2 + $0xb0] sm:$0xff]
    %v180 = vld [vmem:[#allocation2 + $0xb8] sm:$0xff]
    %v181 = vld [vmem:[#allocation2 + $0xc0] sm:$0xff]
    %v182 = vld [vmem:[#allocation2 + $0xc8] sm:$0xff]
    %v183 = vld [vmem:[#allocation2 + $0xd0] sm:$0xff]
    %v184 = vld [vmem:[#allocation2 + $0xd8] sm:$0xff]
    %v185 = vld [vmem:[#allocation4 + $0x18] sm:$0x1]
    %v186 = vld [vmem:[#allocation4 + $0x19] sm:$0x1]
    %v187 = vld [vmem:[#allocation4 + $0x1a] sm:$0x1]
    %v188 = vld [vmem:[#allocation4 + $0x1b] sm:$0x1]
    %v189 = vld [vmem:[#allocation4 + $0x1c] sm:$0x1]
    %v190 = vld [vmem:[#allocation4 + $0x1d] sm:$0x1]
    %v192 = vsel %vm81, %v163, 0
    %v195 = vsel %vm81, %v164, 0
    %197 = vmatprep.subr.mxu0 0.0
    %198 = vmatpush1.msra.mxu0 %v165
    %199 = vmatprep.subr.mxu0 0.0
    %200 = vmatpush1.msra.mxu0 %v166
    %201 = vmatprep.subr.mxu0 0.0
    %202 = vmatpush1.msra.mxu0 %v167
    %203 = vmatprep.subr.mxu0 0.0
    %204 = vmatpush1.msra.mxu0 %v168
    %205 = vmatprep.subr.mxu0 0.0
    %206 = vmatpush1.msra.mxu0 0.0
    %207 = vmatprep.subr.mxu0 0.0
    %208 = vmatpush1.msra.mxu0 0.0
    %209 = vmatprep.subr.mxu0 0.0
    %210 = vmatpush1.msra.mxu0 0.0
    %211 = vmatprep.subr.mxu0 0.0
    %212 = vmatpush1.msra.mxu0 0.0
    %213 = vmatprep.subr.mxu0 0.0
    %214 = vmatpush1.msra.mxu0 0.0
    %215 = vmatprep.subr.mxu0 0.0
    %216 = vmatpush1.msra.mxu0 0.0
    %217 = vmatprep.subr.mxu0 0.0
    %218 = vmatpush1.msra.mxu0 0.0
    %219 = vmatprep.subr.mxu0 0.0
    %220 = vmatpush1.msra.mxu0 0.0
    %221 = vmatprep.subr.mxu0 0.0
    %222 = vmatpush1.msra.mxu0 0.0
    %223 = vmatprep.subr.mxu0 0.0
    %224 = vmatpush1.msra.mxu0 0.0
    %225 = vmatprep.subr.mxu0 0.0
    %226 = vmatpush1.msra.mxu0 0.0
    %227 = vmatprep.subr.mxu0 0.0
    %228 = vmatpush1.msra.mxu0 0.0
    %229 = vmatprep.subr.mxu0 0.0
    %230 = vmatpush1.msra.mxu0 0.0
    %231 = vmatprep.subr.mxu0 0.0
    %232 = vmatpush1.msra.mxu0 0.0
    %233 = vmatprep.subr.mxu0 0.0
    %234 = vmatpush1.msra.mxu0 0.0
    %235 = vmatprep.subr.mxu0 0.0
    %236 = vmatpush1.msra.mxu0 0.0
    %237 = vmatprep.subr.mxu0 0.0
    %238 = vmatpush1.msra.mxu0 0.0
    %239 = vmatprep.subr.mxu0 0.0
    %240 = vmatpush1.msra.mxu0 0.0
    %241 = vmatprep.subr.mxu0 0.0
    %242 = vmatpush1.msra.mxu0 0.0
    %243 = vmatprep.subr.mxu0 0.0
    %244 = vmatpush1.msra.mxu0 0.0
    %245 = vmatprep.subr.mxu0 0.0
    %246 = vmatpush1.msra.mxu0 0.0
    %247 = vmatprep.subr.mxu0 0.0
    %248 = vmatpush1.msra.mxu0 0.0
    %249 = vmatprep.subr.mxu0 0.0
    %250 = vmatpush1.msra.mxu0 0.0
    %251 = vmatprep.subr.mxu0 0.0
    %252 = vmatpush1.msra.mxu0 0.0
    %253 = vmatprep.subr.mxu0 0.0
    %254 = vmatpush1.msra.mxu0 0.0
    %255 = vmatprep.subr.mxu0 0.0
    %256 = vmatpush1.msra.mxu0 0.0
    %257 = vmatprep.subr.mxu0 0.0
    %258 = vmatpush1.msra.mxu0 0.0
    %259 = vmatprep.subr.mxu0 0.0
    %260 = vmatpush1.msra.mxu0 0.0
    %261 = vmatprep.mubr.f32.mxu0 0.0
    %262 = vmatmul.mubr.f32.gmra.mrb[0].mxu0 %v192
    %v263 = vpop.f32.mrb[0].mxu0
    %v264 = vadd.f32 0.0, %v263
    %v265 = vpop.f32.mrb[0].mxu0
    %266 = vmatprep.mubr.f32.mxu0 0.0
    %267 = vmatmul.mubr.f32.gmra.mrb[0].mxu0 %v195
    %v268 = vpop.f32.mrb[0].mxu0
    %v269 = vadd.f32 0.0, %v268
    %v270 = vpop.f32.mrb[0].mxu0
    %271 = vdwg.mxu0
    %274 = vrot.lane.b32.xlu0 %v264, 96
    %v275 = vpop.permute.xlu0 %274
    %276 = vrot.lane.b32.xlu0 %v269, 96
    %v277 = vpop.permute.xlu0 %276
    %vm278 = vcmask 130048
    %v279 = vsel %vm278, %v264, 0
    %v281 = vsel %vm278, %v269, 0
    %v283 = vsel %vm278, %v275, 0
    %v285 = vsel %vm278, %v277, 0
    %287 = vmatprep.subr.mxu0 0.0
    %288 = vmatpush1.xpose.msra.mxu0 %v283
    %289 = vmatprep.subr.mxu0 0.0
    %290 = vmatpush1.xpose.msra.mxu0 %v285
    %291 = vmatprep.subr.mxu0 0.0
    %292 = vmatpush1.xpose.msra.mxu0 0.0
    %293 = vmatprep.subr.mxu0 0.0
    %294 = vmatpush1.xpose.msra.mxu0 0.0
    %295 = vmatprep.subr.mxu0 0.0
    %296 = vmatpush1.xpose.msra.mxu0 0.0
    %297 = vmatprep.subr.mxu0 0.0
    %298 = vmatpush1.xpose.msra.mxu0 0.0
    %299 = vmatprep.subr.mxu0 0.0
    %300 = vmatpush1.xpose.msra.mxu0 0.0
    %301 = vmatprep.subr.mxu0 0.0
    %302 = vmatpush1.xpose.msra.mxu0 0.0
    %303 = vmatprep.subr.mxu0 0.0
    %304 = vmatpush1.xpose.msra.mxu0 0.0
    %305 = vmatprep.subr.mxu0 0.0
    %306 = vmatpush1.xpose.msra.mxu0 0.0
    %307 = vmatprep.subr.mxu0 0.0
    %308 = vmatpush1.xpose.msra.mxu0 0.0
    %309 = vmatprep.subr.mxu0 0.0
    %310 = vmatpush1.xpose.msra.mxu0 0.0
    %311 = vmatprep.subr.mxu0 0.0
    %312 = vmatpush1.xpose.msra.mxu0 0.0
    %313 = vmatprep.subr.mxu0 0.0
    %314 = vmatpush1.xpose.msra.mxu0 0.0
    %315 = vmatprep.subr.mxu0 0.0
    %316 = vmatpush1.xpose.msra.mxu0 0.0
    %317 = vmatprep.subr.mxu0 0.0
    %318 = vmatpush1.xpose.msra.mxu0 0.0
    %319 = vmatprep.subr.mxu0 0.0
    %320 = vmatpush1.xpose.msra.mxu0 0.0
    %321 = vmatprep.subr.mxu0 0.0
    %322 = vmatpush1.xpose.msra.mxu0 0.0
    %323 = vmatprep.subr.mxu0 0.0
    %324 = vmatpush1.xpose.msra.mxu0 0.0
    %325 = vmatprep.subr.mxu0 0.0
    %326 = vmatpush1.xpose.msra.mxu0 0.0
    %327 = vmatprep.subr.mxu0 0.0
    %328 = vmatpush1.xpose.msra.mxu0 0.0
    %329 = vmatprep.subr.mxu0 0.0
    %330 = vmatpush1.xpose.msra.mxu0 0.0
    %331 = vmatprep.subr.mxu0 0.0
    %332 = vmatpush1.xpose.msra.mxu0 0.0
    %333 = vmatprep.subr.mxu0 0.0
    %334 = vmatpush1.xpose.msra.mxu0 0.0
    %335 = vmatprep.subr.mxu0 0.0
    %336 = vmatpush1.xpose.msra.mxu0 0.0
    %337 = vmatprep.subr.mxu0 0.0
    %338 = vmatpush1.xpose.msra.mxu0 0.0
    %339 = vmatprep.subr.mxu0 0.0
    %340 = vmatpush1.xpose.msra.mxu0 0.0
    %341 = vmatprep.subr.mxu0 0.0
    %342 = vmatpush1.xpose.msra.mxu0 0.0
    %343 = vmatprep.subr.mxu0 0.0
    %344 = vmatpush1.xpose.msra.mxu0 0.0
    %345 = vmatprep.subr.mxu0 0.0
    %346 = vmatpush1.xpose.msra.mxu0 0.0
    %347 = vmatprep.subr.mxu0 0.0
    %348 = vmatpush1.xpose.msra.mxu0 0.0
    %349 = vmatprep.subr.mxu0 0.0
    %350 = vmatpush1.xpose.msra.mxu0 0.0
    %351 = vmatprep.mubr.f32.mxu0 0.0
    %352 = vmatmul.mubr.f32.gmra.mrb[0].mxu0 %v279
    %v353 = vpop.f32.mrb[0].mxu0
    %v354 = vadd.f32 0.0, %v353
    %v355 = vpop.f32.mrb[0].mxu0
    %356 = vmatprep.mubr.f32.mxu0 0.0
    %357 = vmatmul.mubr.f32.gmra.mrb[0].mxu0 %v281
    %v358 = vpop.f32.mrb[0].mxu0
    %v359 = vadd.f32 0.0, %v358
    %v360 = vpop.f32.mrb[0].mxu0
    %361 = vdwg.mxu0
    %v362 = vmul.f32 %v354, 0.25
    %v363 = vmul.f32 %v359, 0.25
    %v364 = vadd.f32 %v362, %v59
    %v365 = vadd.f32 %v363, %v60
    %v366 = vsel %vm278, %v364, -inf
    %367 = vmax.xlane.f32.xlu0 %v366
    %v368 = vpop.xlane.xlu0 %367
    %v369 = vsel %vm278, %v365, -inf
    %370 = vmax.xlane.f32.xlu0 %v369
    %v371 = vpop.xlane.xlu0 %370
    %v372 = vsub.f32 %v364, %v368
    %v373 = vsub.f32 %v365, %v371
    %v374 = vmul.f32 %v372, 1.442695
    %v375 = vpow.pop %v374
    %v376 = vmul.f32 %v373, 1.442695
    %v377 = vpow.pop %v376
    %v378 = vsel %vm278, %v375, 0.0
    %379 = vadd.xlane.f32.xlu0 %v378
    %v380 = vpop.xlane.xlu0 %379
    %v381 = vsel %vm278, %v377, 0.0
    %382 = vadd.xlane.f32.xlu0 %v381
    %v383 = vpop.xlane.xlu0 %382
    %v384 = vrcp.pop %v380
    %v385 = vrcp.pop %v383
    %v386 = vmul.f32 %v375, %v384
    %v387 = vmul.f32 %v377, %v385
    %388 = vrot.lane.b32.xlu0 %v264, 64
    %v389 = vpop.permute.xlu0 %388
    %390 = vrot.lane.b32.xlu0 %v269, 64
    %v391 = vpop.permute.xlu0 %390
    %v395 = vsel %vm278, %v386, 0
    %v398 = vsel %vm278, %v387, 0
    %400 = vmatprep.subr.mxu0 0.0
    %401 = vmatpush1.msra.mxu0 %v389
    %402 = vmatprep.subr.mxu0 0.0
    %403 = vmatpush1.msra.mxu0 %v391
    %404 = vmatprep.subr.mxu0 0.0
    %405 = vmatpush1.msra.mxu0 0.0
    %406 = vmatprep.subr.mxu0 0.0
    %407 = vmatpush1.msra.mxu0 0.0
    %408 = vmatprep.subr.mxu0 0.0
    %409 = vmatpush1.msra.mxu0 0.0
    %410 = vmatprep.subr.mxu0 0.0
    %411 = vmatpush1.msra.mxu0 0.0
    %412 = vmatprep.subr.mxu0 0.0
    %413 = vmatpush1.msra.mxu0 0.0
    %414 = vmatprep.subr.mxu0 0.0
    %415 = vmatpush1.msra.mxu0 0.0
    %416 = vmatprep.subr.mxu0 0.0
    %417 = vmatpush1.msra.mxu0 0.0
    %418 = vmatprep.subr.mxu0 0.0
    %419 = vmatpush1.msra.mxu0 0.0
    %420 = vmatprep.subr.mxu0 0.0
    %421 = vmatpush1.msra.mxu0 0.0
    %422 = vmatprep.subr.mxu0 0.0
    %423 = vmatpush1.msra.mxu0 0.0
    %424 = vmatprep.subr.mxu0 0.0
    %425 = vmatpush1.msra.mxu0 0.0
    %426 = vmatprep.subr.mxu0 0.0
    %427 = vmatpush1.msra.mxu0 0.0
    %428 = vmatprep.subr.mxu0 0.0
    %429 = vmatpush1.msra.mxu0 0.0
    %430 = vmatprep.subr.mxu0 0.0
    %431 = vmatpush1.msra.mxu0 0.0
    %432 = vmatprep.subr.mxu0 0.0
    %433 = vmatpush1.msra.mxu0 0.0
    %434 = vmatprep.subr.mxu0 0.0
    %435 = vmatpush1.msra.mxu0 0.0
    %436 = vmatprep.subr.mxu0 0.0
    %437 = vmatpush1.msra.mxu0 0.0
    %438 = vmatprep.subr.mxu0 0.0
    %439 = vmatpush1.msra.mxu0 0.0
    %440 = vmatprep.subr.mxu0 0.0
    %441 = vmatpush1.msra.mxu0 0.0
    %442 = vmatprep.subr.mxu0 0.0
    %443 = vmatpush1.msra.mxu0 0.0
    %444 = vmatprep.subr.mxu0 0.0
    %445 = vmatpush1.msra.mxu0 0.0
    %446 = vmatprep.subr.mxu0 0.0
    %447 = vmatpush1.msra.mxu0 0.0
    %448 = vmatprep.subr.mxu0 0.0
    %449 = vmatpush1.msra.mxu0 0.0
    %450 = vmatprep.subr.mxu0 0.0
    %451 = vmatpush1.msra.mxu0 0.0
    %452 = vmatprep.subr.mxu0 0.0
    %453 = vmatpush1.msra.mxu0 0.0
    %454 = vmatprep.subr.mxu0 0.0
    %455 = vmatpush1.msra.mxu0 0.0
    %456 = vmatprep.subr.mxu0 0.0
    %457 = vmatpush1.msra.mxu0 0.0
    %458 = vmatprep.subr.mxu0 0.0
    %459 = vmatpush1.msra.mxu0 0.0
    %460 = vmatprep.subr.mxu0 0.0
    %461 = vmatpush1.msra.mxu0 0.0
    %462 = vmatprep.subr.mxu0 0.0
    %463 = vmatpush1.msra.mxu0 0.0
    %464 = vmatprep.mubr.f32.mxu0 0.0
    %465 = vmatmul.mubr.f32.gmra.mrb[0].mxu0 %v395
    %v466 = vpop.f32.mrb[0].mxu0
    %v467 = vadd.f32 0.0, %v466
    %v468 = vpop.f32.mrb[0].mxu0
    %469 = vmatprep.mubr.f32.mxu0 0.0
    %470 = vmatmul.mubr.f32.gmra.mrb[0].mxu0 %v398
    %v471 = vpop.f32.mrb[0].mxu0
    %v472 = vadd.f32 0.0, %v471
    %v473 = vpop.f32.mrb[0].mxu0
    %474 = vdwg.mxu0
    %475 = vrot.lane.b32.xlu0 %v264, 112
    %v476 = vpop.permute.xlu0 %475
    %477 = vrot.lane.b32.xlu0 %v269, 112
    %v478 = vpop.permute.xlu0 %477
    %479 = vrot.lane.b32.xlu0 %v264, 80
    %v480 = vpop.permute.xlu0 %479
    %481 = vrot.lane.b32.xlu0 %v269, 80
    %v482 = vpop.permute.xlu0 %481
    %v483 = vsel %vm278, %v476, 0
    %v485 = vsel %vm278, %v478, 0
    %v487 = vsel %vm278, %v480, 0
    %v489 = vsel %vm278, %v482, 0
    %491 = vmatprep.subr.mxu0 0.0
    %492 = vmatpush1.xpose.msra.mxu0 %v487
    %493 = vmatprep.subr.mxu0 0.0
    %494 = vmatpush1.xpose.msra.mxu0 %v489
    %495 = vmatprep.subr.mxu0 0.0
    %496 = vmatpush1.xpose.msra.mxu0 0.0
    %497 = vmatprep.subr.mxu0 0.0
    %498 = vmatpush1.xpose.msra.mxu0 0.0
    %499 = vmatprep.subr.mxu0 0.0
    %500 = vmatpush1.xpose.msra.mxu0 0.0
    %501 = vmatprep.subr.mxu0 0.0
    %502 = vmatpush1.xpose.msra.mxu0 0.0
    %503 = vmatprep.subr.mxu0 0.0
    %504 = vmatpush1.xpose.msra.mxu0 0.0
    %505 = vmatprep.subr.mxu0 0.0
    %506 = vmatpush1.xpose.msra.mxu0 0.0
    %507 = vmatprep.subr.mxu0 0.0
    %508 = vmatpush1.xpose.msra.mxu0 0.0
    %509 = vmatprep.subr.mxu0 0.0
    %510 = vmatpush1.xpose.msra.mxu0 0.0
    %511 = vmatprep.subr.mxu0 0.0
    %512 = vmatpush1.xpose.msra.mxu0 0.0
    %513 = vmatprep.subr.mxu0 0.0
    %514 = vmatpush1.xpose.msra.mxu0 0.0
    %515 = vmatprep.subr.mxu0 0.0
    %516 = vmatpush1.xpose.msra.mxu0 0.0
    %517 = vmatprep.subr.mxu0 0.0
    %518 = vmatpush1.xpose.msra.mxu0 0.0
    %519 = vmatprep.subr.mxu0 0.0
    %520 = vmatpush1.xpose.msra.mxu0 0.0
    %521 = vmatprep.subr.mxu0 0.0
    %522 = vmatpush1.xpose.msra.mxu0 0.0
    %523 = vmatprep.subr.mxu0 0.0
    %524 = vmatpush1.xpose.msra.mxu0 0.0
    %525 = vmatprep.subr.mxu0 0.0
    %526 = vmatpush1.xpose.msra.mxu0 0.0
    %527 = vmatprep.subr.mxu0 0.0
    %528 = vmatpush1.xpose.msra.mxu0 0.0
    %529 = vmatprep.subr.mxu0 0.0
    %530 = vmatpush1.xpose.msra.mxu0 0.0
    %531 = vmatprep.subr.mxu0 0.0
    %532 = vmatpush1.xpose.msra.mxu0 0.0
    %533 = vmatprep.subr.mxu0 0.0
    %534 = vmatpush1.xpose.msra.mxu0 0.0
    %535 = vmatprep.subr.mxu0 0.0
    %536 = vmatpush1.xpose.msra.mxu0 0.0
    %537 = vmatprep.subr.mxu0 0.0
    %538 = vmatpush1.xpose.msra.mxu0 0.0
    %539 = vmatprep.subr.mxu0 0.0
    %540 = vmatpush1.xpose.msra.mxu0 0.0
    %541 = vmatprep.subr.mxu0 0.0
    %542 = vmatpush1.xpose.msra.mxu0 0.0
    %543 = vmatprep.subr.mxu0 0.0
    %544 = vmatpush1.xpose.msra.mxu0 0.0
    %545 = vmatprep.subr.mxu0 0.0
    %546 = vmatpush1.xpose.msra.mxu0 0.0
    %547 = vmatprep.subr.mxu0 0.0
    %548 = vmatpush1.xpose.msra.mxu0 0.0
    %549 = vmatprep.subr.mxu0 0.0
    %550 = vmatpush1.xpose.msra.mxu0 0.0
    %551 = vmatprep.subr.mxu0 0.0
    %552 = vmatpush1.xpose.msra.mxu0 0.0
    %553 = vmatprep.subr.mxu0 0.0
    %554 = vmatpush1.xpose.msra.mxu0 0.0
    %555 = vmatprep.mubr.f32.mxu0 0.0
    %556 = vmatmul.mubr.f32.gmra.mrb[0].mxu0 %v483
    %v557 = vpop.f32.mrb[0].mxu0
    %v558 = vadd.f32 0.0, %v557
    %v559 = vpop.f32.mrb[0].mxu0
    %560 = vmatprep.mubr.f32.mxu0 0.0
    %561 = vmatmul.mubr.f32.gmra.mrb[0].mxu0 %v485
    %v562 = vpop.f32.mrb[0].mxu0
    %v563 = vadd.f32 0.0, %v562
    %v564 = vpop.f32.mrb[0].mxu0
    %565 = vdwg.mxu0
    %v566 = vmul.f32 %v558, 0.25
    %v567 = vmul.f32 %v563, 0.25
    %v568 = vadd.f32 %v566, %v59
    %v569 = vadd.f32 %v567, %v60
    %v570 = vsel %vm278, %v568, -inf
    %571 = vmax.xlane.f32.xlu0 %v570
    %v572 = vpop.xlane.xlu0 %571
    %v573 = vsel %vm278, %v569, -inf
    %574 = vmax.xlane.f32.xlu0 %v573
    %v575 = vpop.xlane.xlu0 %574
    %v576 = vsub.f32 %v568, %v572
    %v577 = vsub.f32 %v569, %v575
    %v578 = vmul.f32 %v576, 1.442695
    %v579 = vpow.pop %v578
    %v580 = vmul.f32 %v577, 1.442695
    %v581 = vpow.pop %v580
    %v582 = vsel %vm278, %v579, 0.0
    %583 = vadd.xlane.f32.xlu0 %v582
    %v584 = vpop.xlane.xlu0 %583
    %v585 = vsel %vm278, %v581, 0.0
    %586 = vadd.xlane.f32.xlu0 %v585
    %v587 = vpop.xlane.xlu0 %586
    %v588 = vrcp.pop %v584
    %v589 = vrcp.pop %v587
    %v590 = vmul.f32 %v579, %v588
    %v591 = vmul.f32 %v581, %v589
    %592 = vrot.lane.b32.xlu0 %v264, 48
    %v593 = vpop.permute.xlu0 %592
    %594 = vrot.lane.b32.xlu0 %v269, 48
    %v595 = vpop.permute.xlu0 %594
    %v599 = vsel %vm278, %v590, 0
    %v602 = vsel %vm278, %v591, 0
    %604 = vmatprep.subr.mxu0 0.0
    %605 = vmatpush1.msra.mxu0 %v593
    %606 = vmatprep.subr.mxu0 0.0
    %607 = vmatpush1.msra.mxu0 %v595
    %608 = vmatprep.subr.mxu0 0.0
    %609 = vmatpush1.msra.mxu0 0.0
    %610 = vmatprep.subr.mxu0 0.0
    %611 = vmatpush1.msra.mxu0 0.0
    %612 = vmatprep.subr.mxu0 0.0
    %613 = vmatpush1.msra.mxu0 0.0
    %614 = vmatprep.subr.mxu0 0.0
    %615 = vmatpush1.msra.mxu0 0.0
    %616 = vmatprep.subr.mxu0 0.0
    %617 = vmatpush1.msra.mxu0 0.0
    %618 = vmatprep.subr.mxu0 0.0
    %619 = vmatpush1.msra.mxu0 0.0
    %620 = vmatprep.subr.mxu0 0.0
    %621 = vmatpush1.msra.mxu0 0.0
    %622 = vmatprep.subr.mxu0 0.0
    %623 = vmatpush1.msra.mxu0 0.0
    %624 = vmatprep.subr.mxu0 0.0
    %625 = vmatpush1.msra.mxu0 0.0
    %626 = vmatprep.subr.mxu0 0.0
    %627 = vmatpush1.msra.mxu0 0.0
    %628 = vmatprep.subr.mxu0 0.0
    %629 = vmatpush1.msra.mxu0 0.0
    %630 = vmatprep.subr.mxu0 0.0
    %631 = vmatpush1.msra.mxu0 0.0
    %632 = vmatprep.subr.mxu0 0.0
    %633 = vmatpush1.msra.mxu0 0.0
    %634 = vmatprep.subr.mxu0 0.0
    %635 = vmatpush1.msra.mxu0 0.0
    %636 = vmatprep.subr.mxu0 0.0
    %637 = vmatpush1.msra.mxu0 0.0
    %638 = vmatprep.subr.mxu0 0.0
    %639 = vmatpush1.msra.mxu0 0.0
    %640 = vmatprep.subr.mxu0 0.0
    %641 = vmatpush1.msra.mxu0 0.0
    %642 = vmatprep.subr.mxu0 0.0
    %643 = vmatpush1.msra.mxu0 0.0
    %644 = vmatprep.subr.mxu0 0.0
    %645 = vmatpush1.msra.mxu0 0.0
    %646 = vmatprep.subr.mxu0 0.0
    %647 = vmatpush1.msra.mxu0 0.0
    %648 = vmatprep.subr.mxu0 0.0
    %649 = vmatpush1.msra.mxu0 0.0
    %650 = vmatprep.subr.mxu0 0.0
    %651 = vmatpush1.msra.mxu0 0.0
    %652 = vmatprep.subr.mxu0 0.0
    %653 = vmatpush1.msra.mxu0 0.0
    %654 = vmatprep.subr.mxu0 0.0
    %655 = vmatpush1.msra.mxu0 0.0
    %656 = vmatprep.subr.mxu0 0.0
    %657 = vmatpush1.msra.mxu0 0.0
    %658 = vmatprep.subr.mxu0 0.0
    %659 = vmatpush1.msra.mxu0 0.0
    %660 = vmatprep.subr.mxu0 0.0
    %661 = vmatpush1.msra.mxu0 0.0
    %662 = vmatprep.subr.mxu0 0.0
    %663 = vmatpush1.msra.mxu0 0.0
    %664 = vmatprep.subr.mxu0 0.0
    %665 = vmatpush1.msra.mxu0 0.0
    %666 = vmatprep.subr.mxu0 0.0
    %667 = vmatpush1.msra.mxu0 0.0
    %668 = vmatprep.mubr.f32.mxu0 0.0
    %669 = vmatmul.mubr.f32.gmra.mrb[0].mxu0 %v599
    %v670 = vpop.f32.mrb[0].mxu0
    %v671 = vadd.f32 0.0, %v670
    %v672 = vpop.f32.mrb[0].mxu0
    %673 = vmatprep.mubr.f32.mxu0 0.0
    %674 = vmatmul.mubr.f32.gmra.mrb[0].mxu0 %v602
    %v675 = vpop.f32.mrb[0].mxu0
    %v676 = vadd.f32 0.0, %v675
    %v677 = vpop.f32.mrb[0].mxu0
    %678 = vdwg.mxu0
    %681 = vrot.lane.b32.xlu0 %v671, 16
    %v682 = vpop.permute.xlu0 %681
    %683 = vrot.lane.b32.xlu0 %v676, 16
    %v684 = vpop.permute.xlu0 %683
    %v687 = vsel %vm278, %v467, %v682
    %v688 = vsel %vm278, %v472, %v684
    %v690 = vsel %vm81, %v687, 0
    %v693 = vsel %vm81, %v688, 0
    %695 = vmatprep.subr.mxu0 0.0
    %696 = vmatpush1.msra.mxu0 %v169
    %697 = vmatprep.subr.mxu0 0.0
    %698 = vmatpush1.msra.mxu0 %v170
    %699 = vmatprep.subr.mxu0 0.0
    %700 = vmatpush1.msra.mxu0 %v171
    %701 = vmatprep.subr.mxu0 0.0
    %702 = vmatpush1.msra.mxu0 %v172
    %703 = vmatprep.subr.mxu0 0.0
    %704 = vmatpush1.msra.mxu0 0.0
    %705 = vmatprep.subr.mxu0 0.0
    %706 = vmatpush1.msra.mxu0 0.0
    %707 = vmatprep.subr.mxu0 0.0
    %708 = vmatpush1.msra.mxu0 0.0
    %709 = vmatprep.subr.mxu0 0.0
    %710 = vmatpush1.msra.mxu0 0.0
    %711 = vmatprep.subr.mxu0 0.0
    %712 = vmatpush1.msra.mxu0 0.0
    %713 = vmatprep.subr.mxu0 0.0
    %714 = vmatpush1.msra.mxu0 0.0
    %715 = vmatprep.subr.mxu0 0.0
    %716 = vmatpush1.msra.mxu0 0.0
    %717 = vmatprep.subr.mxu0 0.0
    %718 = vmatpush1.msra.mxu0 0.0
    %719 = vmatprep.subr.mxu0 0.0
    %720 = vmatpush1.msra.mxu0 0.0
    %721 = vmatprep.subr.mxu0 0.0
    %722 = vmatpush1.msra.mxu0 0.0
    %723 = vmatprep.subr.mxu0 0.0
    %724 = vmatpush1.msra.mxu0 0.0
    %725 = vmatprep.subr.mxu0 0.0
    %726 = vmatpush1.msra.mxu0 0.0
    %727 = vmatprep.subr.mxu0 0.0
    %728 = vmatpush1.msra.mxu0 0.0
    %729 = vmatprep.subr.mxu0 0.0
    %730 = vmatpush1.msra.mxu0 0.0
    %731 = vmatprep.subr.mxu0 0.0
    %732 = vmatpush1.msra.mxu0 0.0
    %733 = vmatprep.subr.mxu0 0.0
    %734 = vmatpush1.msra.mxu0 0.0
    %735 = vmatprep.subr.mxu0 0.0
    %736 = vmatpush1.msra.mxu0 0.0
    %737 = vmatprep.subr.mxu0 0.0
    %738 = vmatpush1.msra.mxu0 0.0
    %739 = vmatprep.subr.mxu0 0.0
    %740 = vmatpush1.msra.mxu0 0.0
    %741 = vmatprep.subr.mxu0 0.0
    %742 = vmatpush1.msra.mxu0 0.0
    %743 = vmatprep.subr.mxu0 0.0
    %744 = vmatpush1.msra.mxu0 0.0
    %745 = vmatprep.subr.mxu0 0.0
    %746 = vmatpush1.msra.mxu0 0.0
    %747 = vmatprep.subr.mxu0 0.0
    %748 = vmatpush1.msra.mxu0 0.0
    %749 = vmatprep.subr.mxu0 0.0
    %750 = vmatpush1.msra.mxu0 0.0
    %751 = vmatprep.subr.mxu0 0.0
    %752 = vmatpush1.msra.mxu0 0.0
    %753 = vmatprep.subr.mxu0 0.0
    %754 = vmatpush1.msra.mxu0 0.0
    %755 = vmatprep.subr.mxu0 0.0
    %756 = vmatpush1.msra.mxu0 0.0
    %757 = vmatprep.subr.mxu0 0.0
    %758 = vmatpush1.msra.mxu0 0.0
    %759 = vmatprep.mubr.f32.mxu0 0.0
    %760 = vmatmul.mubr.f32.gmra.mrb[0].mxu0 %v690
    %v761 = vpop.f32.mrb[0].mxu0
    %v762 = vadd.f32 %v163, %v761
    %v763 = vpop.f32.mrb[0].mxu0
    %764 = vmatprep.mubr.f32.mxu0 0.0
    %765 = vmatmul.mubr.f32.gmra.mrb[0].mxu0 %v693
    %v766 = vpop.f32.mrb[0].mxu0
    %v767 = vadd.f32 %v164, %v766
    %v768 = vpop.f32.mrb[0].mxu0
    %769 = vdwg.mxu0
    %v770 = vsel %vm81, %v762, 0.0
    %771 = vadd.xlane.f32.xlu0 %v770
    %v772 = vpop.xlane.xlu0 %771
    %v773 = vsel %vm81, %v767, 0.0
    %774 = vadd.xlane.f32.xlu0 %v773
    %v775 = vpop.xlane.xlu0 %774
    %v776 = vrcp.pop 32.0
    %v777 = vmul.f32 %v772, %v776
    %v778 = vmul.f32 %v775, %v776
    %v779 = vsub.f32 %v762, %v777
    %v780 = vsub.f32 %v767, %v778
    %v781 = vmul.f32 %v779, %v779
    %v782 = vmul.f32 %v780, %v780
    %v783 = vsel %vm81, %v781, 0.0
    %784 = vadd.xlane.f32.xlu0 %v783
    %v785 = vpop.xlane.xlu0 %784
    %v786 = vsel %vm81, %v782, 0.0
    %787 = vadd.xlane.f32.xlu0 %v786
    %v788 = vpop.xlane.xlu0 %787
    %v789 = vmul.f32 %v785, %v776
    %v790 = vmul.f32 %v788, %v776
    %v791 = vadd.f32 %v789, 1e-05
    %v792 = vadd.f32 %v790, 1e-05
    %v793 = vrsqrt.pop %v791
    %v794 = vrsqrt.pop %v792
    %v795 = vmul.f32 %v779, %v793
    %v796 = vmul.f32 %v780, %v794
    %v797 = vlaneseq
    %v798 = vshrl.u32 %v797, 7
    %v799 = vsub.s32 0, %v798
    %v800 = vrot.slane %v187, %v799
    %v801 = vmul.f32 %v795, %v800
    %v802 = vmul.f32 %v796, %v800
    %v803 = vlaneseq
    %v804 = vshrl.u32 %v803, 7
    %v805 = vsub.s32 0, %v804
    %v806 = vrot.slane %v188, %v805
    %v807 = vadd.f32 %v801, %v806
    %v808 = vadd.f32 %v802, %v806
    %v809 = vlaneseq
    %v810 = vshrl.u32 %v809, 7
    %v811 = vsub.s32 0, %v810
    %v812 = vrot.slane %v185, %v811
    %v814 = vsel %vm81, %v807, 0
    %v817 = vsel %vm81, %v808, 0
    %819 = vmatprep.subr.mxu0 0.0
    %820 = vmatpush1.msra.mxu0 %v173
    %821 = vmatprep.subr.mxu0 0.0
    %822 = vmatpush1.msra.mxu0 %v174
    %823 = vmatprep.subr.mxu0 0.0
    %824 = vmatpush1.msra.mxu0 %v175
    %825 = vmatprep.subr.mxu0 0.0
    %826 = vmatpush1.msra.mxu0 %v176
    %827 = vmatprep.subr.mxu0 0.0
    %828 = vmatpush1.msra.mxu0 0.0
    %829 = vmatprep.subr.mxu0 0.0
    %830 = vmatpush1.msra.mxu0 0.0
    %831 = vmatprep.subr.mxu0 0.0
    %832 = vmatpush1.msra.mxu0 0.0
    %833 = vmatprep.subr.mxu0 0.0
    %834 = vmatpush1.msra.mxu0 0.0
    %835 = vmatprep.subr.mxu0 0.0
    %836 = vmatpush1.msra.mxu0 0.0
    %837 = vmatprep.subr.mxu0 0.0
    %838 = vmatpush1.msra.mxu0 0.0
    %839 = vmatprep.subr.mxu0 0.0
    %840 = vmatpush1.msra.mxu0 0.0
    %841 = vmatprep.subr.mxu0 0.0
    %842 = vmatpush1.msra.mxu0 0.0
    %843 = vmatprep.subr.mxu0 0.0
    %844 = vmatpush1.msra.mxu0 0.0
    %845 = vmatprep.subr.mxu0 0.0
    %846 = vmatpush1.msra.mxu0 0.0
    %847 = vmatprep.subr.mxu0 0.0
    %848 = vmatpush1.msra.mxu0 0.0
    %849 = vmatprep.subr.mxu0 0.0
    %850 = vmatpush1.msra.mxu0 0.0
    %851 = vmatprep.subr.mxu0 0.0
    %852 = vmatpush1.msra.mxu0 0.0
    %853 = vmatprep.subr.mxu0 0.0
    %854 = vmatpush1.msra.mxu0 0.0
    %855 = vmatprep.subr.mxu0 0.0
    %856 = vmatpush1.msra.mxu0 0.0
    %857 = vmatprep.subr.mxu0 0.0
    %858 = vmatpush1.msra.mxu0 0.0
    %859 = vmatprep.subr.mxu0 0.0
    %860 = vmatpush1.msra.mxu0 0.0
    %861 = vmatprep.subr.mxu0 0.0
    %862 = vmatpush1.msra.mxu0 0.0
    %863 = vmatprep.subr.mxu0 0.0
    %864 = vmatpush1.msra.mxu0 0.0
    %865 = vmatprep.subr.mxu0 0.0
    %866 = vmatpush1.msra.mxu0 0.0
    %867 = vmatprep.subr.mxu0 0.0
    %868 = vmatpush1.msra.mxu0 0.0
    %869 = vmatprep.subr.mxu0 0.0
    %870 = vmatpush1.msra.mxu0 0.0
    %871 = vmatprep.subr.mxu0 0.0
    %872 = vmatpush1.msra.mxu0 0.0
    %873 = vmatprep.subr.mxu0 0.0
    %874 = vmatpush1.msra.mxu0 0.0
    %875 = vmatprep.subr.mxu0 0.0
    %876 = vmatpush1.msra.mxu0 0.0
    %877 = vmatprep.subr.mxu0 0.0
    %878 = vmatpush1.msra.mxu0 0.0
    %879 = vmatprep.subr.mxu0 0.0
    %880 = vmatpush1.msra.mxu0 0.0
    %881 = vmatprep.subr.mxu0 0.0
    %882 = vmatpush1.msra.mxu0 0.0
    %883 = vmatprep.mubr.f32.mxu0 0.0
    %884 = vmatmul.mubr.f32.gmra.mrb[0].mxu0 %v814
    %v885 = vpop.f32.mrb[0].mxu0
    %v886 = vadd.f32 %v812, %v885
    %v887 = vpop.f32.mrb[0].mxu0
    %888 = vmatprep.mubr.f32.mxu0 0.0
    %889 = vmatmul.mubr.f32.gmra.mrb[0].mxu0 %v817
    %v890 = vpop.f32.mrb[0].mxu0
    %v891 = vadd.f32 %v812, %v890
    %v892 = vpop.f32.mrb[0].mxu0
    %893 = vdwg.mxu0
    %v894 = vmax.f32 %v886, 0.0
    %v895 = vmax.f32 %v891, 0.0
    %v896 = vlaneseq
    %v897 = vshrl.u32 %v896, 7
    %v898 = vsub.s32 0, %v897
    %v899 = vrot.slane %v186, %v898
    %vm900 = vcmask 523264
    %v902 = vsel %vm900, %v894, 0
    %v905 = vsel %vm900, %v895, 0
    %907 = vmatprep.subr.mxu0 0.0
    %908 = vmatpush1.msra.mxu0 %v177
    %909 = vmatprep.subr.mxu0 0.0
    %910 = vmatpush1.msra.mxu0 %v178
    %911 = vmatprep.subr.mxu0 0.0
    %912 = vmatpush1.msra.mxu0 %v179
    %913 = vmatprep.subr.mxu0 0.0
    %914 = vmatpush1.msra.mxu0 %v180
    %915 = vmatprep.subr.mxu0 0.0
    %916 = vmatpush1.msra.mxu0 %v181
    %917 = vmatprep.subr.mxu0 0.0
    %918 = vmatpush1.msra.mxu0 %v182
    %919 = vmatprep.subr.mxu0 0.0
    %920 = vmatpush1.msra.mxu0 %v183
    %921 = vmatprep.subr.mxu0 0.0
    %922 = vmatpush1.msra.mxu0 %v184
    %923 = vmatprep.subr.mxu0 0.0
    %924 = vmatpush1.msra.mxu0 0.0
    %925 = vmatprep.subr.mxu0 0.0
    %926 = vmatpush1.msra.mxu0 0.0
    %927 = vmatprep.subr.mxu0 0.0
    %928 = vmatpush1.msra.mxu0 0.0
    %929 = vmatprep.subr.mxu0 0.0
    %930 = vmatpush1.msra.mxu0 0.0
    %931 = vmatprep.subr.mxu0 0.0
    %932 = vmatpush1.msra.mxu0 0.0
    %933 = vmatprep.subr.mxu0 0.0
    %934 = vmatpush1.msra.mxu0 0.0
    %935 = vmatprep.subr.mxu0 0.0
    %936 = vmatpush1.msra.mxu0 0.0
    %937 = vmatprep.subr.mxu0 0.0
    %938 = vmatpush1.msra.mxu0 0.0
    %939 = vmatprep.subr.mxu0 0.0
    %940 = vmatpush1.msra.mxu0 0.0
    %941 = vmatprep.subr.mxu0 0.0
    %942 = vmatpush1.msra.mxu0 0.0
    %943 = vmatprep.subr.mxu0 0.0
    %944 = vmatpush1.msra.mxu0 0.0
    %945 = vmatprep.subr.mxu0 0.0
    %946 = vmatpush1.msra.mxu0 0.0
    %947 = vmatprep.subr.mxu0 0.0
    %948 = vmatpush1.msra.mxu0 0.0
    %949 = vmatprep.subr.mxu0 0.0
    %950 = vmatpush1.msra.mxu0 0.0
    %951 = vmatprep.subr.mxu0 0.0
    %952 = vmatpush1.msra.mxu0 0.0
    %953 = vmatprep.subr.mxu0 0.0
    %954 = vmatpush1.msra.mxu0 0.0
    %955 = vmatprep.subr.mxu0 0.0
    %956 = vmatpush1.msra.mxu0 0.0
    %957 = vmatprep.subr.mxu0 0.0
    %958 = vmatpush1.msra.mxu0 0.0
    %959 = vmatprep.subr.mxu0 0.0
    %960 = vmatpush1.msra.mxu0 0.0
    %961 = vmatprep.subr.mxu0 0.0
    %962 = vmatpush1.msra.mxu0 0.0
    %963 = vmatprep.subr.mxu0 0.0
    %964 = vmatpush1.msra.mxu0 0.0
    %965 = vmatprep.subr.mxu0 0.0
    %966 = vmatpush1.msra.mxu0 0.0
    %967 = vmatprep.subr.mxu0 0.0
    %968 = vmatpush1.msra.mxu0 0.0
    %969 = vmatprep.subr.mxu0 0.0
    %970 = vmatpush1.msra.mxu0 0.0
    %971 = vmatprep.mubr.f32.mxu0 0.0
    %972 = vmatmul.mubr.f32.gmra.mrb[0].mxu0 %v902
    %v973 = vpop.f32.mrb[0].mxu0
    %v974 = vadd.f32 %v899, %v973
    %v975 = vpop.f32.mrb[0].mxu0
    %976 = vmatprep.mubr.f32.mxu0 0.0
    %977 = vmatmul.mubr.f32.gmra.mrb[0].mxu0 %v905
    %v978 = vpop.f32.mrb[0].mxu0
    %v979 = vadd.f32 %v899, %v978
    %v980 = vpop.f32.mrb[0].mxu0
    %981 = vdwg.mxu0
    %v982 = vadd.f32 %v974, %v807
    %v983 = vadd.f32 %v979, %v808
    %v984 = vsel %vm81, %v982, 0.0
    %985 = vadd.xlane.f32.xlu0 %v984
    %v986 = vpop.xlane.xlu0 %985
    %v987 = vsel %vm81, %v983, 0.0
    %988 = vadd.xlane.f32.xlu0 %v987
    %v989 = vpop.xlane.xlu0 %988
    %v990 = vmul.f32 %v986, %v776
    %v991 = vmul.f32 %v989, %v776
    %v992 = vsub.f32 %v982, %v990
    %v993 = vsub.f32 %v983, %v991
    %v994 = vmul.f32 %v992, %v992
    %v995 = vmul.f32 %v993, %v993
    %v996 = vsel %vm81, %v994, 0.0
    %997 = vadd.xlane.f32.xlu0 %v996
    %v998 = vpop.xlane.xlu0 %997
    %v999 = vsel %vm81, %v995, 0.0
    %1000 = vadd.xlane.f32.xlu0 %v999
    %v1001 = vpop.xlane.xlu0 %1000
    %v1002 = vmul.f32 %v998, %v776
    %v1003 = vmul.f32 %v1001, %v776
    %v1004 = vadd.f32 %v1002, 1e-05
    %v1005 = vadd.f32 %v1003, 1e-05
    %v1006 = vrsqrt.pop %v1004
    %v1007 = vrsqrt.pop %v1005
    %v1008 = vmul.f32 %v992, %v1006
    %v1009 = vmul.f32 %v993, %v1007
    %v1010 = vlaneseq
    %v1011 = vshrl.u32 %v1010, 7
    %v1012 = vsub.s32 0, %v1011
    %v1013 = vrot.slane %v189, %v1012
    %v1014 = vmul.f32 %v1008, %v1013
    %v1015 = vmul.f32 %v1009, %v1013
    %v1016 = vlaneseq
    %v1017 = vshrl.u32 %v1016, 7
    %v1018 = vsub.s32 0, %v1017
    %v1019 = vrot.slane %v190, %v1018
    %v1020 = vadd.f32 %v1014, %v1019
    %v1021 = vadd.f32 %v1015, %v1019
    %v1022 = vld [vmem:[#allocation2 + $0xe0] sm:$0xff]
    %v1023 = vld [vmem:[#allocation2 + $0xe8] sm:$0xff]
    %v1024 = vld [vmem:[#allocation2 + $0xf0] sm:$0xff]
    %v1025 = vld [vmem:[#allocation2 + $0xf8] sm:$0xff]
    %v1026 = vld [vmem:[#allocation2 + $0x100] sm:$0xff]
    %v1027 = vld [vmem:[#allocation2 + $0x108] sm:$0xff]
    %v1028 = vld [vmem:[#allocation2 + $0x110] sm:$0xff]
    %v1029 = vld [vmem:[#allocation2 + $0x118] sm:$0xff]
    %v1030 = vld [vmem:[#allocation2 + $0x120] sm:$0xff]
    %v1031 = vld [vmem:[#allocation2 + $0x128] sm:$0xff]
    %v1032 = vld [vmem:[#allocation2 + $0x130] sm:$0xff]
    %v1033 = vld [vmem:[#allocation2 + $0x138] sm:$0xff]
    %v1034 = vld [vmem:[#allocation2 + $0x140] sm:$0xff]
    %v1035 = vld [vmem:[#allocation2 + $0x148] sm:$0xff]
    %v1036 = vld [vmem:[#allocation2 + $0x150] sm:$0xff]
    %v1037 = vld [vmem:[#allocation2 + $0x158] sm:$0xff]
    %v1038 = vld [vmem:[#allocation2 + $0x160] sm:$0xff]
    %v1039 = vld [vmem:[#allocation2 + $0x168] sm:$0xff]
    %v1040 = vld [vmem:[#allocation2 + $0x170] sm:$0xff]
    %v1041 = vld [vmem:[#allocation2 + $0x178] sm:$0xff]
    %v1042 = vld [vmem:[#allocation4 + $0x20] sm:$0x1]
    %v1043 = vld [vmem:[#allocation4 + $0x21] sm:$0x1]
    %v1044 = vld [vmem:[#allocation4 + $0x22] sm:$0x1]
    %v1045 = vld [vmem:[#allocation4 + $0x23] sm:$0x1]
    %v1046 = vld [vmem:[#allocation4 + $0x24] sm:$0x1]
    %v1047 = vld [vmem:[#allocation4 + $0x25] sm:$0x1]
    %v1049 = vsel %vm81, %v1020, 0
    %v1052 = vsel %vm81, %v1021, 0
    %1054 = vmatprep.subr.mxu0 0.0
    %1055 = vmatpush1.msra.mxu0 %v1022
    %1056 = vmatprep.subr.mxu0 0.0
    %1057 = vmatpush1.msra.mxu0 %v1023
    %1058 = vmatprep.subr.mxu0 0.0
    %1059 = vmatpush1.msra.mxu0 %v1024
    %1060 = vmatprep.subr.mxu0 0.0
    %1061 = vmatpush1.msra.mxu0 %v1025
    %1062 = vmatprep.subr.mxu0 0.0
    %1063 = vmatpush1.msra.mxu0 0.0
    %1064 = vmatprep.subr.mxu0 0.0
    %1065 = vmatpush1.msra.mxu0 0.0
    %1066 = vmatprep.subr.mxu0 0.0
    %1067 = vmatpush1.msra.mxu0 0.0
    %1068 = vmatprep.subr.mxu0 0.0
    %1069 = vmatpush1.msra.mxu0 0.0
    %1070 = vmatprep.subr.mxu0 0.0
    %1071 = vmatpush1.msra.mxu0 0.0
    %1072 = vmatprep.subr.mxu0 0.0
    %1073 = vmatpush1.msra.mxu0 0.0
    %1074 = vmatprep.subr.mxu0 0.0
    %1075 = vmatpush1.msra.mxu0 0.0
    %1076 = vmatprep.subr.mxu0 0.0
    %1077 = vmatpush1.msra.mxu0 0.0
    %1078 = vmatprep.subr.mxu0 0.0
    %1079 = vmatpush1.msra.mxu0 0.0
    %1080 = vmatprep.subr.mxu0 0.0
    %1081 = vmatpush1.msra.mxu0 0.0
    %1082 = vmatprep.subr.mxu0 0.0
    %1083 = vmatpush1.msra.mxu0 0.0
    %1084 = vmatprep.subr.mxu0 0.0
    %1085 = vmatpush1.msra.mxu0 0.0
    %1086 = vmatprep.subr.mxu0 0.0
    %1087 = vmatpush1.msra.mxu0 0.0
    %1088 = vmatprep.subr.mxu0 0.0
    %1089 = vmatpush1.msra.mxu0 0.0
    %1090 = vmatprep.subr.mxu0 0.0
    %1091 = vmatpush1.msra.mxu0 0.0
    %1092 = vmatprep.subr.mxu0 0.0
    %1093 = vmatpush1.msra.mxu0 0.0
    %1094 = vmatprep.subr.mxu0 0.0
    %1095 = vmatpush1.msra.mxu0 0.0
    %1096 = vmatprep.subr.mxu0 0.0
    %1097 = vmatpush1.msra.mxu0 0.0
    %1098 = vmatprep.subr.mxu0 0.0
    %1099 = vmatpush1.msra.mxu0 0.0
    %1100 = vmatprep.subr.mxu0 0.0
    %1101 = vmatpush1.msra.mxu0 0.0
    %1102 = vmatprep.subr.mxu0 0.0
    %1103 = vmatpush1.msra.mxu0 0.0
    %1104 = vmatprep.subr.mxu0 0.0
    %1105 = vmatpush1.msra.mxu0 0.0
    %1106 = vmatprep.subr.mxu0 0.0
    %1107 = vmatpush1.msra.mxu0 0.0
    %1108 = vmatprep.subr.mxu0 0.0
    %1109 = vmatpush1.msra.mxu0 0.0
    %1110 = vmatprep.subr.mxu0 0.0
    %1111 = vmatpush1.msra.mxu0 0.0
    %1112 = vmatprep.subr.mxu0 0.0
    %1113 = vmatpush1.msra.mxu0 0.0
    %1114 = vmatprep.subr.mxu0 0.0
    %1115 = vmatpush1.msra.mxu0 0.0
    %1116 = vmatprep.subr.mxu0 0.0
    %1117 = vmatpush1.msra.mxu0 0.0
    %1118 = vmatprep.mubr.f32.mxu0 0.0
    %1119 = vmatmul.mubr.f32.gmra.mrb[0].mxu0 %v1049
    %v1120 = vpop.f32.mrb[0].mxu0
    %v1121 = vadd.f32 0.0, %v1120
    %v1122 = vpop.f32.mrb[0].mxu0
    %1123 = vmatprep.mubr.f32.mxu0 0.0
    %1124 = vmatmul.mubr.f32.gmra.mrb[0].mxu0 %v1052
    %v1125 = vpop.f32.mrb[0].mxu0
    %v1126 = vadd.f32 0.0, %v1125
    %v1127 = vpop.f32.mrb[0].mxu0
    %1128 = vdwg.mxu0
    %1131 = vrot.lane.b32.xlu0 %v1121, 96
    %v1132 = vpop.permute.xlu0 %1131
    %1133 = vrot.lane.b32.xlu0 %v1126, 96
    %v1134 = vpop.permute.xlu0 %1133
    %v1135 = vsel %vm278, %v1121, 0
    %v1137 = vsel %vm278, %v1126, 0
    %v1139 = vsel %vm278, %v1132, 0
    %v1141 = vsel %vm278, %v1134, 0
    %1143 = vmatprep.subr.mxu0 0.0
    %1144 = vmatpush1.xpose.msra.mxu0 %v1139
    %1145 = vmatprep.subr.mxu0 0.0
    %1146 = vmatpush1.xpose.msra.mxu0 %v1141
    %1147 = vmatprep.subr.mxu0 0.0
    %1148 = vmatpush1.xpose.msra.mxu0 0.0
    %1149 = vmatprep.subr.mxu0 0.0
    %1150 = vmatpush1.xpose.msra.mxu0 0.0
    %1151 = vmatprep.subr.mxu0 0.0
    %1152 = vmatpush1.xpose.msra.mxu0 0.0
    %1153 = vmatprep.subr.mxu0 0.0
    %1154 = vmatpush1.xpose.msra.mxu0 0.0
    %1155 = vmatprep.subr.mxu0 0.0
    %1156 = vmatpush1.xpose.msra.mxu0 0.0
    %1157 = vmatprep.subr.mxu0 0.0
    %1158 = vmatpush1.xpose.msra.mxu0 0.0
    %1159 = vmatprep.subr.mxu0 0.0
    %1160 = vmatpush1.xpose.msra.mxu0 0.0
    %1161 = vmatprep.subr.mxu0 0.0
    %1162 = vmatpush1.xpose.msra.mxu0 0.0
    %1163 = vmatprep.subr.mxu0 0.0
    %1164 = vmatpush1.xpose.msra.mxu0 0.0
    %1165 = vmatprep.subr.mxu0 0.0
    %1166 = vmatpush1.xpose.msra.mxu0 0.0
    %1167 = vmatprep.subr.mxu0 0.0
    %1168 = vmatpush1.xpose.msra.mxu0 0.0
    %1169 = vmatprep.subr.mxu0 0.0
    %1170 = vmatpush1.xpose.msra.mxu0 0.0
    %1171 = vmatprep.subr.mxu0 0.0
    %1172 = vmatpush1.xpose.msra.mxu0 0.0
    %1173 = vmatprep.subr.mxu0 0.0
    %1174 = vmatpush1.xpose.msra.mxu0 0.0
    %1175 = vmatprep.subr.mxu0 0.0
    %1176 = vmatpush1.xpose.msra.mxu0 0.0
    %1177 = vmatprep.subr.mxu0 0.0
    %1178 = vmatpush1.xpose.msra.mxu0 0.0
    %1179 = vmatprep.subr.mxu0 0.0
    %1180 = vmatpush1.xpose.msra.mxu0 0.0
    %1181 = vmatprep.subr.mxu0 0.0
    %1182 = vmatpush1.xpose.msra.mxu0 0.0
    %1183 = vmatprep.subr.mxu0 0.0
    %1184 = vmatpush1.xpose.msra.mxu0 0.0
    %1185 = vmatprep.subr.mxu0 0.0
    %1186 = vmatpush1.xpose.msra.mxu0 0.0
    %1187 = vmatprep.subr.mxu0 0.0
    %1188 = vmatpush1.xpose.msra.mxu0 0.0
    %1189 = vmatprep.subr.mxu0 0.0
    %1190 = vmatpush1.xpose.msra.mxu0 0.0
    %1191 = vmatprep.subr.mxu0 0.0
    %1192 = vmatpush1.xpose.msra.mxu0 0.0
    %1193 = vmatprep.subr.mxu0 0.0
    %1194 = vmatpush1.xpose.msra.mxu0 0.0
    %1195 = vmatprep.subr.mxu0 0.0
    %1196 = vmatpush1.xpose.msra.mxu0 0.0
    %1197 = vmatprep.subr.mxu0 0.0
    %1198 = vmatpush1.xpose.msra.mxu0 0.0
    %1199 = vmatprep.subr.mxu0 0.0
    %1200 = vmatpush1.xpose.msra.mxu0 0.0
    %1201 = vmatprep.subr.mxu0 0.0
    %1202 = vmatpush1.xpose.msra.mxu0 0.0
    %1203 = vmatprep.subr.mxu0 0.0
    %1204 = vmatpush1.xpose.msra.mxu0 0.0
    %1205 = vmatprep.subr.mxu0 0.0
    %1206 = vmatpush1.xpose.msra.mxu0 0.0
    %1207 = vmatprep.mubr.f32.mxu0 0.0
    %1208 = vmatmul.mubr.f32.gmra.mrb[0].mxu0 %v1135
    %v1209 = vpop.f32.mrb[0].mxu0
    %v1210 = vadd.f32 0.0, %v1209
    %v1211 = vpop.f32.mrb[0].mxu0
    %1212 = vmatprep.mubr.f32.mxu0 0.0
    %1213 = vmatmul.mubr.f32.gmra.mrb[0].mxu0 %v1137
    %v1214 = vpop.f32.mrb[0].mxu0
    %v1215 = vadd.f32 0.0, %v1214
    %v1216 = vpop.f32.mrb[0].mxu0
    %1217 = vdwg.mxu0
    %v1218 = vmul.f32 %v1210, 0.25
    %v1219 = vmul.f32 %v1215, 0.25
    %v1220 = vadd.f32 %v1218, %v59
    %v1221 = vadd.f32 %v1219, %v60
    %v1222 = vsel %vm278, %v1220, -inf
    %1223 = vmax.xlane.f32.xlu0 %v1222
    %v1224 = vpop.xlane.xlu0 %1223
    %v1225 = vsel %vm278, %v1221, -inf
    %1226 = vmax.xlane.f32.xlu0 %v1225
    %v1227 = vpop.xlane.xlu0 %1226
    %v1228 = vsub.f32 %v1220, %v1224
    %v1229 = vsub.f32 %v1221, %v1227
    %v1230 = vmul.f32 %v1228, 1.442695
    %v1231 = vpow.pop %v1230
    %v1232 = vmul.f32 %v1229, 1.442695
    %v1233 = vpow.pop %v1232
    %v1234 = vsel %vm278, %v1231, 0.0
    %1235 = vadd.xlane.f32.xlu0 %v1234
    %v1236 = vpop.xlane.xlu0 %1235
    %v1237 = vsel %vm278, %v1233, 0.0
    %1238 = vadd.xlane.f32.xlu0 %v1237
    %v1239 = vpop.xlane.xlu0 %1238
    %v1240 = vrcp.pop %v1236
    %v1241 = vrcp.pop %v1239
    %v1242 = vmul.f32 %v1231, %v1240
    %v1243 = vmul.f32 %v1233, %v1241
    %1244 = vrot.lane.b32.xlu0 %v1121, 64
    %v1245 = vpop.permute.xlu0 %1244
    %1246 = vrot.lane.b32.xlu0 %v1126, 64
    %v1247 = vpop.permute.xlu0 %1246
    %v1251 = vsel %vm278, %v1242, 0
    %v1254 = vsel %vm278, %v1243, 0
    %1256 = vmatprep.subr.mxu0 0.0
    %1257 = vmatpush1.msra.mxu0 %v1245
    %1258 = vmatprep.subr.mxu0 0.0
    %1259 = vmatpush1.msra.mxu0 %v1247
    %1260 = vmatprep.subr.mxu0 0.0
    %1261 = vmatpush1.msra.mxu0 0.0
    %1262 = vmatprep.subr.mxu0 0.0
    %1263 = vmatpush1.msra.mxu0 0.0
    %1264 = vmatprep.subr.mxu0 0.0
    %1265 = vmatpush1.msra.mxu0 0.0
    %1266 = vmatprep.subr.mxu0 0.0
    %1267 = vmatpush1.msra.mxu0 0.0
    %1268 = vmatprep.subr.mxu0 0.0
    %1269 = vmatpush1.msra.mxu0 0.0
    %1270 = vmatprep.subr.mxu0 0.0
    %1271 = vmatpush1.msra.mxu0 0.0
    %1272 = vmatprep.subr.mxu0 0.0
    %1273 = vmatpush1.msra.mxu0 0.0
    %1274 = vmatprep.subr.mxu0 0.0
    %1275 = vmatpush1.msra.mxu0 0.0
    %1276 = vmatprep.subr.mxu0 0.0
    %1277 = vmatpush1.msra.mxu0 0.0
    %1278 = vmatprep.subr.mxu0 0.0
    %1279 = vmatpush1.msra.mxu0 0.0
    %1280 = vmatprep.subr.mxu0 0.0
    %1281 = vmatpush1.msra.mxu0 0.0
    %1282 = vmatprep.subr.mxu0 0.0
    %1283 = vmatpush1.msra.mxu0 0.0
    %1284 = vmatprep.subr.mxu0 0.0
    %1285 = vmatpush1.msra.mxu0 0.0
    %1286 = vmatprep.subr.mxu0 0.0
    %1287 = vmatpush1.msra.mxu0 0.0
    %1288 = vmatprep.subr.mxu0 0.0
    %1289 = vmatpush1.msra.mxu0 0.0
    %1290 = vmatprep.subr.mxu0 0.0
    %1291 = vmatpush1.msra.mxu0 0.0
    %1292 = vmatprep.subr.mxu0 0.0
    %1293 = vmatpush1.msra.mxu0 0.0
    %1294 = vmatprep.subr.mxu0 0.0
    %1295 = vmatpush1.msra.mxu0 0.0
    %1296 = vmatprep.subr.mxu0 0.0
    %1297 = vmatpush1.msra.mxu0 0.0
    %1298 = vmatprep.subr.mxu0 0.0
    %1299 = vmatpush1.msra.mxu0 0.0
    %1300 = vmatprep.subr.mxu0 0.0
    %1301 = vmatpush1.msra.mxu0 0.0
    %1302 = vmatprep.subr.mxu0 0.0
    %1303 = vmatpush1.msra.mxu0 0.0
    %1304 = vmatprep.subr.mxu0 0.0
    %1305 = vmatpush1.msra.mxu0 0.0
    %1306 = vmatprep.subr.mxu0 0.0
    %1307 = vmatpush1.msra.mxu0 0.0
    %1308 = vmatprep.subr.mxu0 0.0
    %1309 = vmatpush1.msra.mxu0 0.0
    %1310 = vmatprep.subr.mxu0 0.0
    %1311 = vmatpush1.msra.mxu0 0.0
    %1312 = vmatprep.subr.mxu0 0.0
    %1313 = vmatpush1.msra.mxu0 0.0
    %1314 = vmatprep.subr.mxu0 0.0
    %1315 = vmatpush1.msra.mxu0 0.0
    %1316 = vmatprep.subr.mxu0 0.0
    %1317 = vmatpush1.msra.mxu0 0.0
    %1318 = vmatprep.subr.mxu0 0.0
    %1319 = vmatpush1.msra.mxu0 0.0
    %1320 = vmatprep.mubr.f32.mxu0 0.0
    %1321 = vmatmul.mubr.f32.gmra.mrb[0].mxu0 %v1251
    %v1322 = vpop.f32.mrb[0].mxu0
    %v1323 = vadd.f32 0.0, %v1322
    %v1324 = vpop.f32.mrb[0].mxu0
    %1325 = vmatprep.mubr.f32.mxu0 0.0
    %1326 = vmatmul.mubr.f32.gmra.mrb[0].mxu0 %v1254
    %v1327 = vpop.f32.mrb[0].mxu0
    %v1328 = vadd.f32 0.0, %v1327
    %v1329 = vpop.f32.mrb[0].mxu0
    %1330 = vdwg.mxu0
    %1331 = vrot.lane.b32.xlu0 %v1121, 112
    %v1332 = vpop.permute.xlu0 %1331
    %1333 = vrot.lane.b32.xlu0 %v1126, 112
    %v1334 = vpop.permute.xlu0 %1333
    %1335 = vrot.lane.b32.xlu0 %v1121, 80
    %v1336 = vpop.permute.xlu0 %1335
    %1337 = vrot.lane.b32.xlu0 %v1126, 80
    %v1338 = vpop.permute.xlu0 %1337
    %v1339 = vsel %vm278, %v1332, 0
    %v1341 = vsel %vm278, %v1334, 0
    %v1343 = vsel %vm278, %v1336, 0
    %v1345 = vsel %vm278, %v1338, 0
    %1347 = vmatprep.subr.mxu0 0.0
    %1348 = vmatpush1.xpose.msra.mxu0 %v1343
    %1349 = vmatprep.subr.mxu0 0.0
    %1350 = vmatpush1.xpose.msra.mxu0 %v1345
    %1351 = vmatprep.subr.mxu0 0.0
    %1352 = vmatpush1.xpose.msra.mxu0 0.0
    %1353 = vmatprep.subr.mxu0 0.0
    %1354 = vmatpush1.xpose.msra.mxu0 0.0
    %1355 = vmatprep.subr.mxu0 0.0
    %1356 = vmatpush1.xpose.msra.mxu0 0.0
    %1357 = vmatprep.subr.mxu0 0.0
    %1358 = vmatpush1.xpose.msra.mxu0 0.0
    %1359 = vmatprep.subr.mxu0 0.0
    %1360 = vmatpush1.xpose.msra.mxu0 0.0
    %1361 = vmatprep.subr.mxu0 0.0
    %1362 = vmatpush1.xpose.msra.mxu0 0.0
    %1363 = vmatprep.subr.mxu0 0.0
    %1364 = vmatpush1.xpose.msra.mxu0 0.0
    %1365 = vmatprep.subr.mxu0 0.0
    %1366 = vmatpush1.xpose.msra.mxu0 0.0
    %1367 = vmatprep.subr.mxu0 0.0
    %1368 = vmatpush1.xpose.msra.mxu0 0.0
    %1369 = vmatprep.subr.mxu0 0.0
    %1370 = vmatpush1.xpose.msra.mxu0 0.0
    %1371 = vmatprep.subr.mxu0 0.0
    %1372 = vmatpush1.xpose.msra.mxu0 0.0
    %1373 = vmatprep.subr.mxu0 0.0
    %1374 = vmatpush1.xpose.msra.mxu0 0.0
    %1375 = vmatprep.subr.mxu0 0.0
    %1376 = vmatpush1.xpose.msra.mxu0 0.0
    %1377 = vmatprep.subr.mxu0 0.0
    %1378 = vmatpush1.xpose.msra.mxu0 0.0
    %1379 = vmatprep.subr.mxu0 0.0
    %1380 = vmatpush1.xpose.msra.mxu0 0.0
    %1381 = vmatprep.subr.mxu0 0.0
    %1382 = vmatpush1.xpose.msra.mxu0 0.0
    %1383 = vmatprep.subr.mxu0 0.0
    %1384 = vmatpush1.xpose.msra.mxu0 0.0
    %1385 = vmatprep.subr.mxu0 0.0
    %1386 = vmatpush1.xpose.msra.mxu0 0.0
    %1387 = vmatprep.subr.mxu0 0.0
    %1388 = vmatpush1.xpose.msra.mxu0 0.0
    %1389 = vmatprep.subr.mxu0 0.0
    %1390 = vmatpush1.xpose.msra.mxu0 0.0
    %1391 = vmatprep.subr.mxu0 0.0
    %1392 = vmatpush1.xpose.msra.mxu0 0.0
    %1393 = vmatprep.subr.mxu0 0.0
    %1394 = vmatpush1.xpose.msra.mxu0 0.0
    %1395 = vmatprep.subr.mxu0 0.0
    %1396 = vmatpush1.xpose.msra.mxu0 0.0
    %1397 = vmatprep.subr.mxu0 0.0
    %1398 = vmatpush1.xpose.msra.mxu0 0.0
    %1399 = vmatprep.subr.mxu0 0.0
    %1400 = vmatpush1.xpose.msra.mxu0 0.0
    %1401 = vmatprep.subr.mxu0 0.0
    %1402 = vmatpush1.xpose.msra.mxu0 0.0
    %1403 = vmatprep.subr.mxu0 0.0
    %1404 = vmatpush1.xpose.msra.mxu0 0.0
    %1405 = vmatprep.subr.mxu0 0.0
    %1406 = vmatpush1.xpose.msra.mxu0 0.0
    %1407 = vmatprep.subr.mxu0 0.0
    %1408 = vmatpush1.xpose.msra.mxu0 0.0
    %1409 = vmatprep.subr.mxu0 0.0
    %1410 = vmatpush1.xpose.msra.mxu0 0.0
    %1411 = vmatprep.mubr.f32.mxu0 0.0
    %1412 = vmatmul.mubr.f32.gmra.mrb[0].mxu0 %v1339
    %v1413 = vpop.f32.mrb[0].mxu0
    %v1414 = vadd.f32 0.0, %v1413
    %v1415 = vpop.f32.mrb[0].mxu0
    %1416 = vmatprep.mubr.f32.mxu0 0.0
    %1417 = vmatmul.mubr.f32.gmra.mrb[0].mxu0 %v1341
    %v1418 = vpop.f32.mrb[0].mxu0
    %v1419 = vadd.f32 0.0, %v1418
    %v1420 = vpop.f32.mrb[0].mxu0
    %1421 = vdwg.mxu0
    %v1422 = vmul.f32 %v1414, 0.25
    %v1423 = vmul.f32 %v1419, 0.25
    %v1424 = vadd.f32 %v1422, %v59
    %v1425 = vadd.f32 %v1423, %v60
    %v1426 = vsel %vm278, %v1424, -inf
    %1427 = vmax.xlane.f32.xlu0 %v1426
    %v1428 = vpop.xlane.xlu0 %1427
    %v1429 = vsel %vm278, %v1425, -inf
    %1430 = vmax.xlane.f32.xlu0 %v1429
    %v1431 = vpop.xlane.xlu0 %1430
    %v1432 = vsub.f32 %v1424, %v1428
    %v1433 = vsub.f32 %v1425, %v1431
    %v1434 = vmul.f32 %v1432, 1.442695
    %v1435 = vpow.pop %v1434
    %v1436 = vmul.f32 %v1433, 1.442695
    %v1437 = vpow.pop %v1436
    %v1438 = vsel %vm278, %v1435, 0.0
    %1439 = vadd.xlane.f32.xlu0 %v1438
    %v1440 = vpop.xlane.xlu0 %1439
    %v1441 = vsel %vm278, %v1437, 0.0
    %1442 = vadd.xlane.f32.xlu0 %v1441
    %v1443 = vpop.xlane.xlu0 %1442
    %v1444 = vrcp.pop %v1440
    %v1445 = vrcp.pop %v1443
    %v1446 = vmul.f32 %v1435, %v1444
    %v1447 = vmul.f32 %v1437, %v1445
    %1448 = vrot.lane.b32.xlu0 %v1121, 48
    %v1449 = vpop.permute.xlu0 %1448
    %1450 = vrot.lane.b32.xlu0 %v1126, 48
    %v1451 = vpop.permute.xlu0 %1450
    %v1455 = vsel %vm278, %v1446, 0
    %v1458 = vsel %vm278, %v1447, 0
    %1460 = vmatprep.subr.mxu0 0.0
    %1461 = vmatpush1.msra.mxu0 %v1449
    %1462 = vmatprep.subr.mxu0 0.0
    %1463 = vmatpush1.msra.mxu0 %v1451
    %1464 = vmatprep.subr.mxu0 0.0
    %1465 = vmatpush1.msra.mxu0 0.0
    %1466 = vmatprep.subr.mxu0 0.0
    %1467 = vmatpush1.msra.mxu0 0.0
    %1468 = vmatprep.subr.mxu0 0.0
    %1469 = vmatpush1.msra.mxu0 0.0
    %1470 = vmatprep.subr.mxu0 0.0
    %1471 = vmatpush1.msra.mxu0 0.0
    %1472 = vmatprep.subr.mxu0 0.0
    %1473 = vmatpush1.msra.mxu0 0.0
    %1474 = vmatprep.subr.mxu0 0.0
    %1475 = vmatpush1.msra.mxu0 0.0
    %1476 = vmatprep.subr.mxu0 0.0
    %1477 = vmatpush1.msra.mxu0 0.0
    %1478 = vmatprep.subr.mxu0 0.0
    %1479 = vmatpush1.msra.mxu0 0.0
    %1480 = vmatprep.subr.mxu0 0.0
    %1481 = vmatpush1.msra.mxu0 0.0
    %1482 = vmatprep.subr.mxu0 0.0
    %1483 = vmatpush1.msra.mxu0 0.0
    %1484 = vmatprep.subr.mxu0 0.0
    %1485 = vmatpush1.msra.mxu0 0.0
    %1486 = vmatprep.subr.mxu0 0.0
    %1487 = vmatpush1.msra.mxu0 0.0
    %1488 = vmatprep.subr.mxu0 0.0
    %1489 = vmatpush1.msra.mxu0 0.0
    %1490 = vmatprep.subr.mxu0 0.0
    %1491 = vmatpush1.msra.mxu0 0.0
    %1492 = vmatprep.subr.mxu0 0.0
    %1493 = vmatpush1.msra.mxu0 0.0
    %1494 = vmatprep.subr.mxu0 0.0
    %1495 = vmatpush1.msra.mxu0 0.0
    %1496 = vmatprep.subr.mxu0 0.0
    %1497 = vmatpush1.msra.mxu0 0.0
    %1498 = vmatprep.subr.mxu0 0.0
    %1499 = vmatpush1.msra.mxu0 0.0
    %1500 = vmatprep.subr.mxu0 0.0
    %1501 = vmatpush1.msra.mxu0 0.0
    %1502 = vmatprep.subr.mxu0 0.0
    %1503 = vmatpush1.msra.mxu0 0.0
    %1504 = vmatprep.subr.mxu0 0.0
    %1505 = vmatpush1.msra.mxu0 0.0
    %1506 = vmatprep.subr.mxu0 0.0
    %1507 = vmatpush1.msra.mxu0 0.0
    %1508 = vmatprep.subr.mxu0 0.0
    %1509 = vmatpush1.msra.mxu0 0.0
    %1510 = vmatprep.subr.mxu0 0.0
    %1511 = vmatpush1.msra.mxu0 0.0
    %1512 = vmatprep.subr.mxu0 0.0
    %1513 = vmatpush1.msra.mxu0 0.0
    %1514 = vmatprep.subr.mxu0 0.0
    %1515 = vmatpush1.msra.mxu0 0.0
    %1516 = vmatprep.subr.mxu0 0.0
    %1517 = vmatpush1.msra.mxu0 0.0
    %1518 = vmatprep.subr.mxu0 0.0
    %1519 = vmatpush1.msra.mxu0 0.0
    %1520 = vmatprep.subr.mxu0 0.0
    %1521 = vmatpush1.msra.mxu0 0.0
    %1522 = vmatprep.subr.mxu0 0.0
    %1523 = vmatpush1.msra.mxu0 0.0
    %1524 = vmatprep.mubr.f32.mxu0 0.0
    %1525 = vmatmul.mubr.f32.gmra.mrb[0].mxu0 %v1455
    %v1526 = vpop.f32.mrb[0].mxu0
    %v1527 = vadd.f32 0.0, %v1526
    %v1528 = vpop.f32.mrb[0].mxu0
    %1529 = vmatprep.mubr.f32.mxu0 0.0
    %1530 = vmatmul.mubr.f32.gmra.mrb[0].mxu0 %v1458
    %v1531 = vpop.f32.mrb[0].mxu0
    %v1532 = vadd.f32 0.0, %v1531
    %v1533 = vpop.f32.mrb[0].mxu0
    %1534 = vdwg.mxu0
    %1537 = vrot.lane.b32.xlu0 %v1527, 16
    %v1538 = vpop.permute.xlu0 %1537
    %1539 = vrot.lane.b32.xlu0 %v1532, 16
    %v1540 = vpop.permute.xlu0 %1539
    %v1543 = vsel %vm278, %v1323, %v1538
    %v1544 = vsel %vm278, %v1328, %v1540
    %v1546 = vsel %vm81, %v1543, 0
    %v1549 = vsel %vm81, %v1544, 0
    %1551 = vmatprep.subr.mxu0 0.0
    %1552 = vmatpush1.msra.mxu0 %v1026
    %1553 = vmatprep.subr.mxu0 0.0
    %1554 = vmatpush1.msra.mxu0 %v1027
    %1555 = vmatprep.subr.mxu0 0.0
    %1556 = vmatpush1.msra.mxu0 %v1028
    %1557 = vmatprep.subr.mxu0 0.0
    %1558 = vmatpush1.msra.mxu0 %v1029
    %1559 = vmatprep.subr.mxu0 0.0
    %1560 = vmatpush1.msra.mxu0 0.0
    %1561 = vmatprep.subr.mxu0 0.0
    %1562 = vmatpush1.msra.mxu0 0.0
    %1563 = vmatprep.subr.mxu0 0.0
    %1564 = vmatpush1.msra.mxu0 0.0
    %1565 = vmatprep.subr.mxu0 0.0
    %1566 = vmatpush1.msra.mxu0 0.0
    %1567 = vmatprep.subr.mxu0 0.0
    %1568 = vmatpush1.msra.mxu0 0.0
    %1569 = vmatprep.subr.mxu0 0.0
    %1570 = vmatpush1.msra.mxu0 0.0
    %1571 = vmatprep.subr.mxu0 0.0
    %1572 = vmatpush1.msra.mxu0 0.0
    %1573 = vmatprep.subr.mxu0 0.0
    %1574 = vmatpush1.msra.mxu0 0.0
    %1575 = vmatprep.subr.mxu0 0.0
    %1576 = vmatpush1.msra.mxu0 0.0
    %1577 = vmatprep.subr.mxu0 0.0
    %1578 = vmatpush1.msra.mxu0 0.0
    %1579 = vmatprep.subr.mxu0 0.0
    %1580 = vmatpush1.msra.mxu0 0.0
    %1581 = vmatprep.subr.mxu0 0.0
    %1582 = vmatpush1.msra.mxu0 0.0
    %1583 = vmatprep.subr.mxu0 0.0
    %1584 = vmatpush1.msra.mxu0 0.0
    %1585 = vmatprep.subr.mxu0 0.0
    %1586 = vmatpush1.msra.mxu0 0.0
    %1587 = vmatprep.subr.mxu0 0.0
    %1588 = vmatpush1.msra.mxu0 0.0
    %1589 = vmatprep.subr.mxu0 0.0
    %1590 = vmatpush1.msra.mxu0 0.0
    %1591 = vmatprep.subr.mxu0 0.0
    %1592 = vmatpush1.msra.mxu0 0.0
    %1593 = vmatprep.subr.mxu0 0.0
    %1594 = vmatpush1.msra.mxu0 0.0
    %1595 = vmatprep.subr.mxu0 0.0
    %1596 = vmatpush1.msra.mxu0 0.0
    %1597 = vmatprep.subr.mxu0 0.0
    %1598 = vmatpush1.msra.mxu0 0.0
    %1599 = vmatprep.subr.mxu0 0.0
    %1600 = vmatpush1.msra.mxu0 0.0
    %1601 = vmatprep.subr.mxu0 0.0
    %1602 = vmatpush1.msra.mxu0 0.0
    %1603 = vmatprep.subr.mxu0 0.0
    %1604 = vmatpush1.msra.mxu0 0.0
    %1605 = vmatprep.subr.mxu0 0.0
    %1606 = vmatpush1.msra.mxu0 0.0
    %1607 = vmatprep.subr.mxu0 0.0
    %1608 = vmatpush1.msra.mxu0 0.0
    %1609 = vmatprep.subr.mxu0 0.0
    %1610 = vmatpush1.msra.mxu0 0.0
    %1611 = vmatprep.subr.mxu0 0.0
    %1612 = vmatpush1.msra.mxu0 0.0
    %1613 = vmatprep.subr.mxu0 0.0
    %1614 = vmatpush1.msra.mxu0 0.0
    %1615 = vmatprep.mubr.f32.mxu0 0.0
    %1616 = vmatmul.mubr.f32.gmra.mrb[0].mxu0 %v1546
    %v1617 = vpop.f32.mrb[0].mxu0
    %v1618 = vadd.f32 %v1020, %v1617
    %v1619 = vpop.f32.mrb[0].mxu0
    %1620 = vmatprep.mubr.f32.mxu0 0.0
    %1621 = vmatmul.mubr.f32.gmra.mrb[0].mxu0 %v1549
    %v1622 = vpop.f32.mrb[0].mxu0
    %v1623 = vadd.f32 %v1021, %v1622
    %v1624 = vpop.f32.mrb[0].mxu0
    %1625 = vdwg.mxu0
    %v1626 = vsel %vm81, %v1618, 0.0
    %1627 = vadd.xlane.f32.xlu0 %v1626
    %v1628 = vpop.xlane.xlu0 %1627
    %v1629 = vsel %vm81, %v1623, 0.0
    %1630 = vadd.xlane.f32.xlu0 %v1629
    %v1631 = vpop.xlane.xlu0 %1630
    %v1632 = vmul.f32 %v1628, %v776
    %v1633 = vmul.f32 %v1631, %v776
    %v1634 = vsub.f32 %v1618, %v1632
    %v1635 = vsub.f32 %v1623, %v1633
    %v1636 = vmul.f32 %v1634, %v1634
    %v1637 = vmul.f32 %v1635, %v1635
    %v1638 = vsel %vm81, %v1636, 0.0
    %1639 = vadd.xlane.f32.xlu0 %v1638
    %v1640 = vpop.xlane.xlu0 %1639
    %v1641 = vsel %vm81, %v1637, 0.0
    %1642 = vadd.xlane.f32.xlu0 %v1641
    %v1643 = vpop.xlane.xlu0 %1642
    %v1644 = vmul.f32 %v1640, %v776
    %v1645 = vmul.f32 %v1643, %v776
    %v1646 = vadd.f32 %v1644, 1e-05
    %v1647 = vadd.f32 %v1645, 1e-05
    %v1648 = vrsqrt.pop %v1646
    %v1649 = vrsqrt.pop %v1647
    %v1650 = vmul.f32 %v1634, %v1648
    %v1651 = vmul.f32 %v1635, %v1649
    %v1652 = vlaneseq
    %v1653 = vshrl.u32 %v1652, 7
    %v1654 = vsub.s32 0, %v1653
    %v1655 = vrot.slane %v1044, %v1654
    %v1656 = vmul.f32 %v1650, %v1655
    %v1657 = vmul.f32 %v1651, %v1655
    %v1658 = vlaneseq
    %v1659 = vshrl.u32 %v1658, 7
    %v1660 = vsub.s32 0, %v1659
    %v1661 = vrot.slane %v1045, %v1660
    %v1662 = vadd.f32 %v1656, %v1661
    %v1663 = vadd.f32 %v1657, %v1661
    %v1664 = vlaneseq
    %v1665 = vshrl.u32 %v1664, 7
    %v1666 = vsub.s32 0, %v1665
    %v1667 = vrot.slane %v1042, %v1666
    %v1669 = vsel %vm81, %v1662, 0
    %v1672 = vsel %vm81, %v1663, 0
    %1674 = vmatprep.subr.mxu0 0.0
    %1675 = vmatpush1.msra.mxu0 %v1030
    %1676 = vmatprep.subr.mxu0 0.0
    %1677 = vmatpush1.msra.mxu0 %v1031
    %1678 = vmatprep.subr.mxu0 0.0
    %1679 = vmatpush1.msra.mxu0 %v1032
    %1680 = vmatprep.subr.mxu0 0.0
    %1681 = vmatpush1.msra.mxu0 %v1033
    %1682 = vmatprep.subr.mxu0 0.0
    %1683 = vmatpush1.msra.mxu0 0.0
    %1684 = vmatprep.subr.mxu0 0.0
    %1685 = vmatpush1.msra.mxu0 0.0
    %1686 = vmatprep.subr.mxu0 0.0
    %1687 = vmatpush1.msra.mxu0 0.0
    %1688 = vmatprep.subr.mxu0 0.0
    %1689 = vmatpush1.msra.mxu0 0.0
    %1690 = vmatprep.subr.mxu0 0.0
    %1691 = vmatpush1.msra.mxu0 0.0
    %1692 = vmatprep.subr.mxu0 0.0
    %1693 = vmatpush1.msra.mxu0 0.0
    %1694 = vmatprep.subr.mxu0 0.0
    %1695 = vmatpush1.msra.mxu0 0.0
    %1696 = vmatprep.subr.mxu0 0.0
    %1697 = vmatpush1.msra.mxu0 0.0
    %1698 = vmatprep.subr.mxu0 0.0
    %1699 = vmatpush1.msra.mxu0 0.0
    %1700 = vmatprep.subr.mxu0 0.0
    %1701 = vmatpush1.msra.mxu0 0.0
    %1702 = vmatprep.subr.mxu0 0.0
    %1703 = vmatpush1.msra.mxu0 0.0
    %1704 = vmatprep.subr.mxu0 0.0
    %1705 = vmatpush1.msra.mxu0 0.0
    %1706 = vmatprep.subr.mxu0 0.0
    %1707 = vmatpush1.msra.mxu0 0.0
    %1708 = vmatprep.subr.mxu0 0.0
    %1709 = vmatpush1.msra.mxu0 0.0
    %1710 = vmatprep.subr.mxu0 0.0
    %1711 = vmatpush1.msra.mxu0 0.0
    %1712 = vmatprep.subr.mxu0 0.0
    %1713 = vmatpush1.msra.mxu0 0.0
    %1714 = vmatprep.subr.mxu0 0.0
    %1715 = vmatpush1.msra.mxu0 0.0
    %1716 = vmatprep.subr.mxu0 0.0
    %1717 = vmatpush1.msra.mxu0 0.0
    %1718 = vmatprep.subr.mxu0 0.0
    %1719 = vmatpush1.msra.mxu0 0.0
    %1720 = vmatprep.subr.mxu0 0.0
    %1721 = vmatpush1.msra.mxu0 0.0
    %1722 = vmatprep.subr.mxu0 0.0
    %1723 = vmatpush1.msra.mxu0 0.0
    %1724 = vmatprep.subr.mxu0 0.0
    %1725 = vmatpush1.msra.mxu0 0.0
    %1726 = vmatprep.subr.mxu0 0.0
    %1727 = vmatpush1.msra.mxu0 0.0
    %1728 = vmatprep.subr.mxu0 0.0
    %1729 = vmatpush1.msra.mxu0 0.0
    %1730 = vmatprep.subr.mxu0 0.0
    %1731 = vmatpush1.msra.mxu0 0.0
    %1732 = vmatprep.subr.mxu0 0.0
    %1733 = vmatpush1.msra.mxu0 0.0
    %1734 = vmatprep.subr.mxu0 0.0
    %1735 = vmatpush1.msra.mxu0 0.0
    %1736 = vmatprep.subr.mxu0 0.0
    %1737 = vmatpush1.msra.mxu0 0.0
    %1738 = vmatprep.mubr.f32.mxu0 0.0
    %1739 = vmatmul.mubr.f32.gmra.mrb[0].mxu0 %v1669
    %v1740 = vpop.f32.mrb[0].mxu0
    %v1741 = vadd.f32 %v1667, %v1740
    %v1742 = vpop.f32.mrb[0].mxu0
    %1743 = vmatprep.mubr.f32.mxu0 0.0
    %1744 = vmatmul.mubr.f32.gmra.mrb[0].mxu0 %v1672
    %v1745 = vpop.f32.mrb[0].mxu0
    %v1746 = vadd.f32 %v1667, %v1745
    %v1747 = vpop.f32.mrb[0].mxu0
    %1748 = vdwg.mxu0
    %v1749 = vmax.f32 %v1741, 0.0
    %v1750 = vmax.f32 %v1746, 0.0
    %v1751 = vlaneseq
    %v1752 = vshrl.u32 %v1751, 7
    %v1753 = vsub.s32 0, %v1752
    %v1754 = vrot.slane %v1043, %v1753
    %v1756 = vsel %vm900, %v1749, 0
    %v1759 = vsel %vm900, %v1750, 0
    %1761 = vmatprep.subr.mxu0 0.0
    %1762 = vmatpush1.msra.mxu0 %v1034
    %1763 = vmatprep.subr.mxu0 0.0
    %1764 = vmatpush1.msra.mxu0 %v1035
    %1765 = vmatprep.subr.mxu0 0.0
    %1766 = vmatpush1.msra.mxu0 %v1036
    %1767 = vmatprep.subr.mxu0 0.0
    %1768 = vmatpush1.msra.mxu0 %v1037
    %1769 = vmatprep.subr.mxu0 0.0
    %1770 = vmatpush1.msra.mxu0 %v1038
    %1771 = vmatprep.subr.mxu0 0.0
    %1772 = vmatpush1.msra.mxu0 %v1039
    %1773 = vmatprep.subr.mxu0 0.0
    %1774 = vmatpush1.msra.mxu0 %v1040
    %1775 = vmatprep.subr.mxu0 0.0
    %1776 = vmatpush1.msra.mxu0 %v1041
    %1777 = vmatprep.subr.mxu0 0.0
    %1778 = vmatpush1.msra.mxu0 0.0
    %1779 = vmatprep.subr.mxu0 0.0
    %1780 = vmatpush1.msra.mxu0 0.0
    %1781 = vmatprep.subr.mxu0 0.0
    %1782 = vmatpush1.msra.mxu0 0.0
    %1783 = vmatprep.subr.mxu0 0.0
    %1784 = vmatpush1.msra.mxu0 0.0
    %1785 = vmatprep.subr.mxu0 0.0
    %1786 = vmatpush1.msra.mxu0 0.0
    %1787 = vmatprep.subr.mxu0 0.0
    %1788 = vmatpush1.msra.mxu0 0.0
    %1789 = vmatprep.subr.mxu0 0.0
    %1790 = vmatpush1.msra.mxu0 0.0
    %1791 = vmatprep.subr.mxu0 0.0
    %1792 = vmatpush1.msra.mxu0 0.0
    %1793 = vmatprep.subr.mxu0 0.0
    %1794 = vmatpush1.msra.mxu0 0.0
    %1795 = vmatprep.subr.mxu0 0.0
    %1796 = vmatpush1.msra.mxu0 0.0
    %1797 = vmatprep.subr.mxu0 0.0
    %1798 = vmatpush1.msra.mxu0 0.0
    %1799 = vmatprep.subr.mxu0 0.0
    %1800 = vmatpush1.msra.mxu0 0.0
    %1801 = vmatprep.subr.mxu0 0.0
    %1802 = vmatpush1.msra.mxu0 0.0
    %1803 = vmatprep.subr.mxu0 0.0
    %1804 = vmatpush1.msra.mxu0 0.0
    %1805 = vmatprep.subr.mxu0 0.0
    %1806 = vmatpush1.msra.mxu0 0.0
    %1807 = vmatprep.subr.mxu0 0.0
    %1808 = vmatpush1.msra.mxu0 0.0
    %1809 = vmatprep.subr.mxu0 0.0
    %1810 = vmatpush1.msra.mxu0 0.0
    %1811 = vmatprep.subr.mxu0 0.0
    %1812 = vmatpush1.msra.mxu0 0.0
    %1813 = vmatprep.subr.mxu0 0.0
    %1814 = vmatpush1.msra.mxu0 0.0
    %1815 = vmatprep.subr.mxu0 0.0
    %1816 = vmatpush1.msra.mxu0 0.0
    %1817 = vmatprep.subr.mxu0 0.0
    %1818 = vmatpush1.msra.mxu0 0.0
    %1819 = vmatprep.subr.mxu0 0.0
    %1820 = vmatpush1.msra.mxu0 0.0
    %1821 = vmatprep.subr.mxu0 0.0
    %1822 = vmatpush1.msra.mxu0 0.0
    %1823 = vmatprep.subr.mxu0 0.0
    %1824 = vmatpush1.msra.mxu0 0.0
    %1825 = vmatprep.mubr.f32.mxu0 0.0
    %1826 = vmatmul.mubr.f32.gmra.mrb[0].mxu0 %v1756
    %v1827 = vpop.f32.mrb[0].mxu0
    %v1828 = vadd.f32 %v1754, %v1827
    %v1829 = vpop.f32.mrb[0].mxu0
    %1830 = vmatprep.mubr.f32.mxu0 0.0
    %1831 = vmatmul.mubr.f32.gmra.mrb[0].mxu0 %v1759
    %v1832 = vpop.f32.mrb[0].mxu0
    %v1833 = vadd.f32 %v1754, %v1832
    %v1834 = vpop.f32.mrb[0].mxu0
    %1835 = vdwg.mxu0
    %v1836 = vadd.f32 %v1828, %v1662
    %v1837 = vadd.f32 %v1833, %v1663
    %v1838 = vsel %vm81, %v1836, 0.0
    %1839 = vadd.xlane.f32.xlu0 %v1838
    %v1840 = vpop.xlane.xlu0 %1839
    %v1841 = vsel %vm81, %v1837, 0.0
    %1842 = vadd.xlane.f32.xlu0 %v1841
    %v1843 = vpop.xlane.xlu0 %1842
    %v1844 = vmul.f32 %v1840, %v776
    %v1845 = vmul.f32 %v1843, %v776
    %v1846 = vsub.f32 %v1836, %v1844
    %v1847 = vsub.f32 %v1837, %v1845
    %v1848 = vmul.f32 %v1846, %v1846
    %v1849 = vmul.f32 %v1847, %v1847
    %v1850 = vsel %vm81, %v1848, 0.0
    %1851 = vadd.xlane.f32.xlu0 %v1850
    %v1852 = vpop.xlane.xlu0 %1851
    %v1853 = vsel %vm81, %v1849, 0.0
    %1854 = vadd.xlane.f32.xlu0 %v1853
    %v1855 = vpop.xlane.xlu0 %1854
    %v1856 = vmul.f32 %v1852, %v776
    %v1857 = vmul.f32 %v1855, %v776
    %v1858 = vadd.f32 %v1856, 1e-05
    %v1859 = vadd.f32 %v1857, 1e-05
    %v1860 = vrsqrt.pop %v1858
    %v1861 = vrsqrt.pop %v1859
    %v1862 = vmul.f32 %v1846, %v1860
    %v1863 = vmul.f32 %v1847, %v1861
    %v1864 = vlaneseq
    %v1865 = vshrl.u32 %v1864, 7
    %v1866 = vsub.s32 0, %v1865
    %v1867 = vrot.slane %v1046, %v1866
    %v1868 = vmul.f32 %v1862, %v1867
    %v1869 = vmul.f32 %v1863, %v1867
    %v1870 = vlaneseq
    %v1871 = vshrl.u32 %v1870, 7
    %v1872 = vsub.s32 0, %v1871
    %v1873 = vrot.slane %v1047, %v1872
    %v1874 = vadd.f32 %v1868, %v1873
    %v1875 = vadd.f32 %v1869, %v1873
    %v1876 = vld [vmem:[#allocation2 + $0x20] sm:$0xff]
    %v1877 = vld [vmem:[#allocation2 + $0x28] sm:$0xff]
    %v1878 = vld [vmem:[#allocation2 + $0x30] sm:$0xff]
    %v1879 = vld [vmem:[#allocation2 + $0x38] sm:$0xff]
    %v1880 = vld [vmem:[#allocation4 + $0x10] sm:$0x1]
    %v1881 = vlaneseq
    %v1882 = vshrl.u32 %v1881, 7
    %v1883 = vsub.s32 0, %v1882
    %v1884 = vrot.slane %v1880, %v1883
    %v1886 = vsel %vm81, %v1874, 0
    %v1889 = vsel %vm81, %v1875, 0
    %1891 = vmatprep.subr.mxu0 0.0
    %1892 = vmatpush1.msra.mxu0 %v1876
    %1893 = vmatprep.subr.mxu0 0.0
    %1894 = vmatpush1.msra.mxu0 %v1877
    %1895 = vmatprep.subr.mxu0 0.0
    %1896 = vmatpush1.msra.mxu0 %v1878
    %1897 = vmatprep.subr.mxu0 0.0
    %1898 = vmatpush1.msra.mxu0 %v1879
    %1899 = vmatprep.subr.mxu0 0.0
    %1900 = vmatpush1.msra.mxu0 0.0
    %1901 = vmatprep.subr.mxu0 0.0
    %1902 = vmatpush1.msra.mxu0 0.0
    %1903 = vmatprep.subr.mxu0 0.0
    %1904 = vmatpush1.msra.mxu0 0.0
    %1905 = vmatprep.subr.mxu0 0.0
    %1906 = vmatpush1.msra.mxu0 0.0
    %1907 = vmatprep.subr.mxu0 0.0
    %1908 = vmatpush1.msra.mxu0 0.0
    %1909 = vmatprep.subr.mxu0 0.0
    %1910 = vmatpush1.msra.mxu0 0.0
    %1911 = vmatprep.subr.mxu0 0.0
    %1912 = vmatpush1.msra.mxu0 0.0
    %1913 = vmatprep.subr.mxu0 0.0
    %1914 = vmatpush1.msra.mxu0 0.0
    %1915 = vmatprep.subr.mxu0 0.0
    %1916 = vmatpush1.msra.mxu0 0.0
    %1917 = vmatprep.subr.mxu0 0.0
    %1918 = vmatpush1.msra.mxu0 0.0
    %1919 = vmatprep.subr.mxu0 0.0
    %1920 = vmatpush1.msra.mxu0 0.0
    %1921 = vmatprep.subr.mxu0 0.0
    %1922 = vmatpush1.msra.mxu0 0.0
    %1923 = vmatprep.subr.mxu0 0.0
    %1924 = vmatpush1.msra.mxu0 0.0
    %1925 = vmatprep.subr.mxu0 0.0
    %1926 = vmatpush1.msra.mxu0 0.0
    %1927 = vmatprep.subr.mxu0 0.0
    %1928 = vmatpush1.msra.mxu0 0.0
    %1929 = vmatprep.subr.mxu0 0.0
    %1930 = vmatpush1.msra.mxu0 0.0
    %1931 = vmatprep.subr.mxu0 0.0
    %1932 = vmatpush1.msra.mxu0 0.0
    %1933 = vmatprep.subr.mxu0 0.0
    %1934 = vmatpush1.msra.mxu0 0.0
    %1935 = vmatprep.subr.mxu0 0.0
    %1936 = vmatpush1.msra.mxu0 0.0
    %1937 = vmatprep.subr.mxu0 0.0
    %1938 = vmatpush1.msra.mxu0 0.0
    %1939 = vmatprep.subr.mxu0 0.0
    %1940 = vmatpush1.msra.mxu0 0.0
    %1941 = vmatprep.subr.mxu0 0.0
    %1942 = vmatpush1.msra.mxu0 0.0
    %1943 = vmatprep.subr.mxu0 0.0
    %1944 = vmatpush1.msra.mxu0 0.0
    %1945 = vmatprep.subr.mxu0 0.0
    %1946 = vmatpush1.msra.mxu0 0.0
    %1947 = vmatprep.subr.mxu0 0.0
    %1948 = vmatpush1.msra.mxu0 0.0
    %1949 = vmatprep.subr.mxu0 0.0
    %1950 = vmatpush1.msra.mxu0 0.0
    %1951 = vmatprep.subr.mxu0 0.0
    %1952 = vmatpush1.msra.mxu0 0.0
    %1953 = vmatprep.subr.mxu0 0.0
    %1954 = vmatpush1.msra.mxu0 0.0
    %1955 = vmatprep.mubr.f32.mxu0 0.0
    %1956 = vmatmul.mubr.f32.gmra.mrb[0].mxu0 %v1886
    %v1957 = vpop.f32.mrb[0].mxu0
    %v1958 = vadd.f32 %v1884, %v1957
    %v1959 = vpop.f32.mrb[0].mxu0
    %1960 = vmatprep.mubr.f32.mxu0 0.0
    %1961 = vmatmul.mubr.f32.gmra.mrb[0].mxu0 %v1889
    %v1962 = vpop.f32.mrb[0].mxu0
    %v1963 = vadd.f32 %v1884, %v1962
    %v1964 = vpop.f32.mrb[0].mxu0
    %1965 = vdwg.mxu0
    %1966 = vmax.xlane.f32.xlu0 %v1958
    %v1967 = vpop.xlane.xlu0 %1966
    %1968 = vmax.xlane.f32.xlu0 %v1963
    %v1969 = vpop.xlane.xlu0 %1968
    %v1970 = vsub.f32 %v1958, %v1967
    %v1971 = vsub.f32 %v1963, %v1969
    %v1972 = vmul.f32 %v1970, 1.442695
    %v1973 = vpow.pop %v1972
    %v1974 = vmul.f32 %v1971, 1.442695
    %v1975 = vpow.pop %v1974
    %1976 = vadd.xlane.f32.xlu0 %v1973
    %v1977 = vpop.xlane.xlu0 %1976
    %1978 = vadd.xlane.f32.xlu0 %v1975
    %v1979 = vpop.xlane.xlu0 %1978
    %v1980 = vlog2.pop %v1977
    %v1981 = vmul.f32 %v1980, 0.6931472
    %v1982 = vlog2.pop %v1979
    %v1983 = vmul.f32 %v1982, 0.6931472
    %v1984 = vsub.f32 %v1970, %v1981
    %v1985 = vsub.f32 %v1971, %v1983
    %1986 = vst [vmem:[%s3] sm:$0xff] %v1984
    %1987 = vst [vmem:[%s3 + $0x8] sm:$0xff] %v1985
    // Predicated region
    $region22: #{transformer_forward.1} parent=1 // pred_check
      _
    $region23: #{transformer_forward.1} parent=1 // pred_check_branch
      %1989 = sbr.rel (0) target = $region25
    $region24: #{transformer_forward.1} parent=1 // pred_region
      _
    $region25: #{transformer_forward.1} parent=1 // pred_fallthru
      _
    // Predicated region
    $region26: #{transformer_forward.1} parent=1 // pred_check
      _
    $region27: #{transformer_forward.1} parent=1 // pred_check_branch
      %1991 = sbr.rel (0) target = $region29
    $region28: #{transformer_forward.1} parent=1 // pred_region
      _
    $region29: #{transformer_forward.1} parent=1 // pred_fallthru
      _
    %1992 = vsyncpa [#allocation3], 1
    %1993 = vsyncpa [#allocation5], 1

</llo_original>
